<compile_context>
chip_gen: v7x
topology: tpu7x:2x2x1
jax: 0.10.0
libtpu: 0.0.40
codegen_flags: <defaults>
</compile_context>

<pallas_src>
import math

import jax
import jax.numpy as jnp
from jax.experimental import pallas as pl
from jax.experimental.pallas import tpu as pltpu


def lstm_kernel(xp_ref, wh_ref, h_out_ref, c_out_ref, h_st, c_st):
    """One grid step == one block of Tb timesteps.

    xp_ref : (Tb, B, 4H)  precomputed x @ Wx_all + b_all
    wh_ref : (H, 4H)      fused recurrent weights (constant across grid)
    h_out_ref, c_out_ref : (Tb, B, H) outputs for this time block
    h_st, c_st : (B, H)   VMEM scratch carrying state across time blocks
    """
    # h_0 = c_0 = 0 at the very first time block.
    @pl.when(pl.program_id(0) == 0)
    def _():
        h_st[...] = jnp.zeros_like(h_st)
        c_st[...] = jnp.zeros_like(c_st)

    wh = wh_ref[...]                 # [H, 4H], stays resident for the block
    tb = xp_ref.shape[0]             # static time-block length
    hdim = h_st.shape[1]             # static hidden dim

    def step(t, carry):
        h_prev, c_prev = carry
        # Single fused recurrent matmul: [B,H] @ [H,4H] -> [B,4H]
        pre = xp_ref[t] + jnp.dot(h_prev, wh,
                                  preferred_element_type=jnp.float32)
        # Static lane slices of the fused pre-activations (gate order g,i,f,o).
        g = jnp.tanh(pre[:, 0 * hdim:1 * hdim])
        i = jax.nn.sigmoid(pre[:, 1 * hdim:2 * hdim])
        f = jax.nn.sigmoid(pre[:, 2 * hdim:3 * hdim])
        o = jax.nn.sigmoid(pre[:, 3 * hdim:4 * hdim])
        c_next = f * c_prev + i * g
        h_next = o * jnp.tanh(c_next)
        h_out_ref[t] = h_next
        c_out_ref[t] = c_next
        return (h_next, c_next)

    # Short, fixed trip count: unroll so the LLO scheduler sees all steps.
    h_last, c_last = jax.lax.fori_loop(
        0, tb, step, (h_st[...], c_st[...]), unroll=True)
    h_st[...] = h_last
    c_st[...] = c_last


def _pick_time_block(T, max_tb=16):
    """Largest divisor of T that is <= max_tb (time-block length)."""
    tb = 1
    for cand in range(1, min(T, max_tb) + 1):
        if T % cand == 0:
            tb = cand
    return tb


def lstm_forward(embeds, params, *, max_time_block=16):
    T, B, D = embeds.shape
    H = params["W_g"].shape[0]

    def split(W):
        # W is [H, D+H]; torch.mm(cat(x,h), W.T) == x @ W[:, :D].T + h @ W[:, D:].T
        return jnp.transpose(W[:, :D]), jnp.transpose(W[:, D:])

    wgx, wgh = split(params["W_g"])
    wix, wih = split(params["W_i"])
    wfx, wfh = split(params["W_f"])
    wox, woh = split(params["W_o"])

    # Fused weights/biases, gate order [g, i, f, o] along the 4H axis.
    wx_all = jnp.concatenate([wgx, wix, wfx, wox], axis=1)            # [D, 4H]
    wh_all = jnp.concatenate([wgh, wih, wfh, woh], axis=1)            # [H, 4H]
    b_all = jnp.concatenate([params["b_g"], params["b_i"],
                             params["b_f"], params["b_o"]], axis=0)   # [4H]

    # Hoisted, time-parallel input projection: ONE [T*B, D] @ [D, 4H] matmul
    # (plus bias) instead of 4 matmuls per timestep inside the recurrence.
    x_proj = (jnp.dot(embeds.reshape(T * B, D).astype(jnp.float32), wx_all,
                      preferred_element_type=jnp.float32)
              + b_all).reshape(T, B, 4 * H)

    Tb = _pick_time_block(T, max_time_block)
    grid = (T // Tb,)

    xp_spec = pl.BlockSpec((Tb, B, 4 * H), lambda t: (t, 0, 0))
    # Constant index_map -> weights DMA'd once for the whole call.
    # (At production H: bf16 weights + pipeline_mode=pl.Buffered(1) to halve
    #  VMEM residency for the 64 MiB v7x budget.)
    wh_spec = pl.BlockSpec((H, 4 * H), lambda t: (0, 0))
    out_spec = pl.BlockSpec((Tb, B, H), lambda t: (t, 0, 0))

    h_seq, c_seq = pl.pallas_call(
        lstm_kernel,
        out_shape=(jax.ShapeDtypeStruct((T, B, H), jnp.float32),
                   jax.ShapeDtypeStruct((T, B, H), jnp.float32)),
        grid_spec=pltpu.PrefetchScalarGridSpec(
            num_scalar_prefetch=0,
            grid=grid,
            in_specs=[xp_spec, wh_spec],
            out_specs=[out_spec, out_spec],
            scratch_shapes=[pltpu.VMEM((B, H), jnp.float32),
                            pltpu.VMEM((B, H), jnp.float32)]),
        compiler_params=pltpu.CompilerParams(
            dimension_semantics=("arbitrary",)),   # time recurrence is serial
    )(x_proj, wh_all)
    return h_seq, c_seq


def init_params(key, hidden_dim, embed_dim):
    # Matches LSTM.__init__/init_parameters:
    #   W_* ~ U(-1/sqrt(H), 1/sqrt(H)); b_g = b_i = b_o = 0; b_f = 1.
    bound = 1.0 / math.sqrt(hidden_dim)
    ks = jax.random.split(key, 4)
    wshape = (hidden_dim, hidden_dim + embed_dim)
    return {
        "W_g": jax.random.uniform(ks[0], wshape, jnp.float32, -bound, bound),
        "W_i": jax.random.uniform(ks[1], wshape, jnp.float32, -bound, bound),
        "W_f": jax.random.uniform(ks[2], wshape, jnp.float32, -bound, bound),
        "W_o": jax.random.uniform(ks[3], wshape, jnp.float32, -bound, bound),
        "b_g": jnp.zeros((hidden_dim,), jnp.float32),
        "b_i": jnp.zeros((hidden_dim,), jnp.float32),
        "b_f": jnp.ones((hidden_dim,), jnp.float32),
        "b_o": jnp.zeros((hidden_dim,), jnp.float32),
    }


def lstm_forward_ref(embeds, params):
    """Pure-JAX reference mirroring the PyTorch forward (for validation)."""
    T, B, D = embeds.shape
    H = params["W_g"].shape[0]

    def step(carry, x_t):
        h_prev, c_prev = carry
        concat = jnp.concatenate([x_t, h_prev], axis=-1)
        g = jnp.tanh(concat @ params["W_g"].T + params["b_g"])
        f = jax.nn.sigmoid(concat @ params["W_f"].T + params["b_f"])
        i = jax.nn.sigmoid(concat @ params["W_i"].T + params["b_i"])
        o = jax.nn.sigmoid(concat @ params["W_o"].T + params["b_o"])
        c_next = f * c_prev + i * g
        h_next = o * jnp.tanh(c_next)
        return (h_next, c_next), (h_next, c_next)

    init = (jnp.zeros((B, H), jnp.float32), jnp.zeros((B, H), jnp.float32))
    _, (h_seq, c_seq) = jax.lax.scan(step, init, embeds)
    return h_seq, c_seq


if __name__ == "__main__":
    T, B = 8, 8
    EMBED_DIM, HIDDEN_DIM = 16, 32

    key = jax.random.PRNGKey(0)
    k_param, k_x = jax.random.split(key)
    params = init_params(k_param, HIDDEN_DIM, EMBED_DIM)
    embeds = jax.random.normal(k_x, (T, B, EMBED_DIM), dtype=jnp.float32)

    h_seq, c_seq = jax.jit(lstm_forward)(embeds, params)
    jax.block_until_ready((h_seq, c_seq))

    h_ref, c_ref = lstm_forward_ref(embeds, params)
    assert h_seq.shape == (T, B, HIDDEN_DIM) and c_seq.shape == (T, B, HIDDEN_DIM)
    assert jnp.allclose(h_seq, h_ref, atol=1e-5, rtol=1e-5)
    assert jnp.allclose(c_seq, c_ref, atol=1e-5, rtol=1e-5)

    print("KERNEL_OK")
</pallas_src>

<mosaic_0001>
module attributes {stable_mosaic.version = 11 : i64} {
  func.func @lstm_kernel(%arg0: i32, %arg1: memref<8x8x128xf32, #tpu.memory_space<vmem>>, %arg2: memref<32x128xf32, #tpu.memory_space<vmem>>, %arg3: memref<8x8x32xf32, #tpu.memory_space<vmem>>, %arg4: memref<8x8x32xf32, #tpu.memory_space<vmem>>, %arg5: memref<8x32xf32, #tpu.memory_space<vmem>>, %arg6: memref<8x32xf32, #tpu.memory_space<vmem>>) attributes {dimension_semantics = [#tpu.dimension_semantics<arbitrary>], iteration_bounds = array<i64: 1>, scalar_prefetch = 0 : i64, scratch_operands = 2 : i64, tpu.core_type = #tpu.core_type<tc>, window_params = [{transform_indices = @transform_0, window_bounds = array<i64: 8, 8, 128>}, {pipeline_mode = #tpu.pipeline_mode<synchronous>, transform_indices = @transform_1, window_bounds = array<i64: 32, 128>}, {transform_indices = @transform_2, window_bounds = array<i64: 8, 8, 32>}, {transform_indices = @transform_3, window_bounds = array<i64: 8, 8, 32>}]} {
    %c0_i32 = arith.constant 0 : i32
    %0 = arith.cmpi eq, %arg0, %c0_i32 : i32
    %1 = arith.extui %0 : i1 to i32
    %c0_i32_0 = arith.constant 0 : i32
    %2 = arith.cmpi ne, %1, %c0_i32_0 : i32
    scf.if %2 {
      %cst_90 = arith.constant 0.000000e+00 : f32
      %312 = vector.broadcast %cst_90 : f32 to vector<8x32xf32>
      %c0_91 = arith.constant 0 : index
      %c0_92 = arith.constant 0 : index
      %313 = vector.load %arg5[%c0_91, %c0_92] : memref<8x32xf32, #tpu.memory_space<vmem>>, vector<8x32xf32>
      tpu.vector_store %arg5[%c0_91, %c0_92], %312 {strides = array<i32>} : memref<8x32xf32, #tpu.memory_space<vmem>>, vector<8x32xf32>,
      %cst_93 = arith.constant 0.000000e+00 : f32
      %314 = vector.broadcast %cst_93 : f32 to vector<8x32xf32>
      %c0_94 = arith.constant 0 : index
      %c0_95 = arith.constant 0 : index
      %315 = vector.load %arg6[%c0_94, %c0_95] : memref<8x32xf32, #tpu.memory_space<vmem>>, vector<8x32xf32>
      tpu.vector_store %arg6[%c0_94, %c0_95], %314 {strides = array<i32>} : memref<8x32xf32, #tpu.memory_space<vmem>>, vector<8x32xf32>,
    } else {
    }
    %c0 = arith.constant 0 : index
    %c0_1 = arith.constant 0 : index
    %3 = vector.load %arg2[%c0, %c0_1] : memref<32x128xf32, #tpu.memory_space<vmem>>, vector<32x128xf32>
    %c0_2 = arith.constant 0 : index
    %c0_3 = arith.constant 0 : index
    %4 = vector.load %arg5[%c0_2, %c0_3] : memref<8x32xf32, #tpu.memory_space<vmem>>, vector<8x32xf32>
    %c0_4 = arith.constant 0 : index
    %c0_5 = arith.constant 0 : index
    %5 = vector.load %arg6[%c0_4, %c0_5] : memref<8x32xf32, #tpu.memory_space<vmem>>, vector<8x32xf32>
    %c0_i32_6 = arith.constant 0 : i32
    %6 = arith.index_cast %c0_i32_6 : i32 to index
    %c0_7 = arith.constant 0 : index
    %c0_8 = arith.constant 0 : index
    %7 = vector.load %arg1[%6, %c0_7, %c0_8] : memref<8x8x128xf32, #tpu.memory_space<vmem>>, vector<1x8x128xf32>
    %8 = vector.shape_cast %7 : vector<1x8x128xf32> to vector<8x128xf32>
    %cst = arith.constant dense<0.000000e+00> : vector<8x128xf32>
    %9 = tpu.matmul %4, %3, %cst {dimension_numbers = #tpu.dot_dimension_numbers<[1], [0], [0], [1], [0, 0, 1, 1], [], []>} : vector<8x32xf32>, vector<32x128xf32>, vector<8x128xf32> -> vector<8x128xf32>
    %10 = arith.addf %8, %9 : vector<8x128xf32>
    %11 = vector.extract_strided_slice %10 {offsets = [0, 0], sizes = [8, 32], strides = [1, 1]} : vector<8x128xf32> to vector<8x32xf32>
    %12 = math.tanh %11 : vector<8x32xf32>
    %13 = vector.extract_strided_slice %10 {offsets = [0, 32], sizes = [8, 32], strides = [1, 1]} : vector<8x128xf32> to vector<8x32xf32>
    %14 = arith.negf %13 : vector<8x32xf32>
    %15 = math.exp %14 : vector<8x32xf32>
    %cst_9 = arith.constant 1.000000e+00 : f32
    %16 = vector.broadcast %cst_9 : f32 to vector<8x32xf32>
    %17 = arith.addf %16, %15 : vector<8x32xf32>
    %18 = arith.divf %16, %17 : vector<8x32xf32>
    %19 = vector.extract_strided_slice %10 {offsets = [0, 64], sizes = [8, 32], strides = [1, 1]} : vector<8x128xf32> to vector<8x32xf32>
    %20 = arith.negf %19 : vector<8x32xf32>
    %21 = math.exp %20 : vector<8x32xf32>
    %cst_10 = arith.constant 1.000000e+00 : f32
    %22 = vector.broadcast %cst_10 : f32 to vector<8x32xf32>
    %23 = arith.addf %22, %21 : vector<8x32xf32>
    %24 = arith.divf %22, %23 : vector<8x32xf32>
    %25 = vector.extract_strided_slice %10 {offsets = [0, 96], sizes = [8, 32], strides = [1, 1]} : vector<8x128xf32> to vector<8x32xf32>
    %26 = arith.negf %25 : vector<8x32xf32>
    %27 = math.exp %26 : vector<8x32xf32>
    %cst_11 = arith.constant 1.000000e+00 : f32
    %28 = vector.broadcast %cst_11 : f32 to vector<8x32xf32>
    %29 = arith.addf %28, %27 : vector<8x32xf32>
    %30 = arith.divf %28, %29 : vector<8x32xf32>
    %31 = arith.mulf %24, %5 : vector<8x32xf32>
    %32 = arith.mulf %18, %12 : vector<8x32xf32>
    %33 = arith.addf %31, %32 : vector<8x32xf32>
    %34 = math.tanh %33 : vector<8x32xf32>
    %35 = arith.mulf %30, %34 : vector<8x32xf32>
    %36 = arith.index_cast %c0_i32_6 : i32 to index
    %c0_12 = arith.constant 0 : index
    %c0_13 = arith.constant 0 : index
    %37 = vector.load %arg3[%36, %c0_12, %c0_13] : memref<8x8x32xf32, #tpu.memory_space<vmem>>, vector<1x8x32xf32>
    %38 = vector.shape_cast %37 : vector<1x8x32xf32> to vector<8x32xf32>
    %39 = vector.shape_cast %35 : vector<8x32xf32> to vector<1x8x32xf32>
    tpu.vector_store %arg3[%36, %c0_12, %c0_13], %39 {strides = array<i32>} : memref<8x8x32xf32, #tpu.memory_space<vmem>>, vector<1x8x32xf32>,
    %40 = arith.index_cast %c0_i32_6 : i32 to index
    %c0_14 = arith.constant 0 : index
    %c0_15 = arith.constant 0 : index
    %41 = vector.load %arg4[%40, %c0_14, %c0_15] : memref<8x8x32xf32, #tpu.memory_space<vmem>>, vector<1x8x32xf32>
    %42 = vector.shape_cast %41 : vector<1x8x32xf32> to vector<8x32xf32>
    %43 = vector.shape_cast %33 : vector<8x32xf32> to vector<1x8x32xf32>
    tpu.vector_store %arg4[%40, %c0_14, %c0_15], %43 {strides = array<i32>} : memref<8x8x32xf32, #tpu.memory_space<vmem>>, vector<1x8x32xf32>,
    %c1_i32 = arith.constant 1 : i32
    %44 = arith.index_cast %c1_i32 : i32 to index
    %c0_16 = arith.constant 0 : index
    %c0_17 = arith.constant 0 : index
    %45 = vector.load %arg1[%44, %c0_16, %c0_17] : memref<8x8x128xf32, #tpu.memory_space<vmem>>, vector<1x8x128xf32>
    %46 = vector.shape_cast %45 : vector<1x8x128xf32> to vector<8x128xf32>
    %cst_18 = arith.constant dense<0.000000e+00> : vector<8x128xf32>
    %47 = tpu.matmul %35, %3, %cst_18 {dimension_numbers = #tpu.dot_dimension_numbers<[1], [0], [0], [1], [0, 0, 1, 1], [], []>} : vector<8x32xf32>, vector<32x128xf32>, vector<8x128xf32> -> vector<8x128xf32>
    %48 = arith.addf %46, %47 : vector<8x128xf32>
    %49 = vector.extract_strided_slice %48 {offsets = [0, 0], sizes = [8, 32], strides = [1, 1]} : vector<8x128xf32> to vector<8x32xf32>
    %50 = math.tanh %49 : vector<8x32xf32>
    %51 = vector.extract_strided_slice %48 {offsets = [0, 32], sizes = [8, 32], strides = [1, 1]} : vector<8x128xf32> to vector<8x32xf32>
    %52 = arith.negf %51 : vector<8x32xf32>
    %53 = math.exp %52 : vector<8x32xf32>
    %cst_19 = arith.constant 1.000000e+00 : f32
    %54 = vector.broadcast %cst_19 : f32 to vector<8x32xf32>
    %55 = arith.addf %54, %53 : vector<8x32xf32>
    %56 = arith.divf %54, %55 : vector<8x32xf32>
    %57 = vector.extract_strided_slice %48 {offsets = [0, 64], sizes = [8, 32], strides = [1, 1]} : vector<8x128xf32> to vector<8x32xf32>
    %58 = arith.negf %57 : vector<8x32xf32>
    %59 = math.exp %58 : vector<8x32xf32>
    %cst_20 = arith.constant 1.000000e+00 : f32
    %60 = vector.broadcast %cst_20 : f32 to vector<8x32xf32>
    %61 = arith.addf %60, %59 : vector<8x32xf32>
    %62 = arith.divf %60, %61 : vector<8x32xf32>
    %63 = vector.extract_strided_slice %48 {offsets = [0, 96], sizes = [8, 32], strides = [1, 1]} : vector<8x128xf32> to vector<8x32xf32>
    %64 = arith.negf %63 : vector<8x32xf32>
    %65 = math.exp %64 : vector<8x32xf32>
    %cst_21 = arith.constant 1.000000e+00 : f32
    %66 = vector.broadcast %cst_21 : f32 to vector<8x32xf32>
    %67 = arith.addf %66, %65 : vector<8x32xf32>
    %68 = arith.divf %66, %67 : vector<8x32xf32>
    %69 = arith.mulf %62, %33 : vector<8x32xf32>
    %70 = arith.mulf %56, %50 : vector<8x32xf32>
    %71 = arith.addf %69, %70 : vector<8x32xf32>
    %72 = math.tanh %71 : vector<8x32xf32>
    %73 = arith.mulf %68, %72 : vector<8x32xf32>
    %74 = arith.index_cast %c1_i32 : i32 to index
    %c0_22 = arith.constant 0 : index
    %c0_23 = arith.constant 0 : index
    %75 = vector.load %arg3[%74, %c0_22, %c0_23] : memref<8x8x32xf32, #tpu.memory_space<vmem>>, vector<1x8x32xf32>
    %76 = vector.shape_cast %75 : vector<1x8x32xf32> to vector<8x32xf32>
    %77 = vector.shape_cast %73 : vector<8x32xf32> to vector<1x8x32xf32>
    tpu.vector_store %arg3[%74, %c0_22, %c0_23], %77 {strides = array<i32>} : memref<8x8x32xf32, #tpu.memory_space<vmem>>, vector<1x8x32xf32>,
    %78 = arith.index_cast %c1_i32 : i32 to index
    %c0_24 = arith.constant 0 : index
    %c0_25 = arith.constant 0 : index
    %79 = vector.load %arg4[%78, %c0_24, %c0_25] : memref<8x8x32xf32, #tpu.memory_space<vmem>>, vector<1x8x32xf32>
    %80 = vector.shape_cast %79 : vector<1x8x32xf32> to vector<8x32xf32>
    %81 = vector.shape_cast %71 : vector<8x32xf32> to vector<1x8x32xf32>
    tpu.vector_store %arg4[%78, %c0_24, %c0_25], %81 {strides = array<i32>} : memref<8x8x32xf32, #tpu.memory_space<vmem>>, vector<1x8x32xf32>,
    %c2_i32 = arith.constant 2 : i32
    %82 = arith.index_cast %c2_i32 : i32 to index
    %c0_26 = arith.constant 0 : index
    %c0_27 = arith.constant 0 : index
    %83 = vector.load %arg1[%82, %c0_26, %c0_27] : memref<8x8x128xf32, #tpu.memory_space<vmem>>, vector<1x8x128xf32>
    %84 = vector.shape_cast %83 : vector<1x8x128xf32> to vector<8x128xf32>
    %cst_28 = arith.constant dense<0.000000e+00> : vector<8x128xf32>
    %85 = tpu.matmul %73, %3, %cst_28 {dimension_numbers = #tpu.dot_dimension_numbers<[1], [0], [0], [1], [0, 0, 1, 1], [], []>} : vector<8x32xf32>, vector<32x128xf32>, vector<8x128xf32> -> vector<8x128xf32>
    %86 = arith.addf %84, %85 : vector<8x128xf32>
    %87 = vector.extract_strided_slice %86 {offsets = [0, 0], sizes = [8, 32], strides = [1, 1]} : vector<8x128xf32> to vector<8x32xf32>
    %88 = math.tanh %87 : vector<8x32xf32>
    %89 = vector.extract_strided_slice %86 {offsets = [0, 32], sizes = [8, 32], strides = [1, 1]} : vector<8x128xf32> to vector<8x32xf32>
    %90 = arith.negf %89 : vector<8x32xf32>
    %91 = math.exp %90 : vector<8x32xf32>
    %cst_29 = arith.constant 1.000000e+00 : f32
    %92 = vector.broadcast %cst_29 : f32 to vector<8x32xf32>
    %93 = arith.addf %92, %91 : vector<8x32xf32>
    %94 = arith.divf %92, %93 : vector<8x32xf32>
    %95 = vector.extract_strided_slice %86 {offsets = [0, 64], sizes = [8, 32], strides = [1, 1]} : vector<8x128xf32> to vector<8x32xf32>
    %96 = arith.negf %95 : vector<8x32xf32>
    %97 = math.exp %96 : vector<8x32xf32>
    %cst_30 = arith.constant 1.000000e+00 : f32
    %98 = vector.broadcast %cst_30 : f32 to vector<8x32xf32>
    %99 = arith.addf %98, %97 : vector<8x32xf32>
    %100 = arith.divf %98, %99 : vector<8x32xf32>
    %101 = vector.extract_strided_slice %86 {offsets = [0, 96], sizes = [8, 32], strides = [1, 1]} : vector<8x128xf32> to vector<8x32xf32>
    %102 = arith.negf %101 : vector<8x32xf32>
    %103 = math.exp %102 : vector<8x32xf32>
    %cst_31 = arith.constant 1.000000e+00 : f32
    %104 = vector.broadcast %cst_31 : f32 to vector<8x32xf32>
    %105 = arith.addf %104, %103 : vector<8x32xf32>
    %106 = arith.divf %104, %105 : vector<8x32xf32>
    %107 = arith.mulf %100, %71 : vector<8x32xf32>
    %108 = arith.mulf %94, %88 : vector<8x32xf32>
    %109 = arith.addf %107, %108 : vector<8x32xf32>
    %110 = math.tanh %109 : vector<8x32xf32>
    %111 = arith.mulf %106, %110 : vector<8x32xf32>
    %112 = arith.index_cast %c2_i32 : i32 to index
    %c0_32 = arith.constant 0 : index
    %c0_33 = arith.constant 0 : index
    %113 = vector.load %arg3[%112, %c0_32, %c0_33] : memref<8x8x32xf32, #tpu.memory_space<vmem>>, vector<1x8x32xf32>
    %114 = vector.shape_cast %113 : vector<1x8x32xf32> to vector<8x32xf32>
    %115 = vector.shape_cast %111 : vector<8x32xf32> to vector<1x8x32xf32>
    tpu.vector_store %arg3[%112, %c0_32, %c0_33], %115 {strides = array<i32>} : memref<8x8x32xf32, #tpu.memory_space<vmem>>, vector<1x8x32xf32>,
    %116 = arith.index_cast %c2_i32 : i32 to index
    %c0_34 = arith.constant 0 : index
    %c0_35 = arith.constant 0 : index
    %117 = vector.load %arg4[%116, %c0_34, %c0_35] : memref<8x8x32xf32, #tpu.memory_space<vmem>>, vector<1x8x32xf32>
    %118 = vector.shape_cast %117 : vector<1x8x32xf32> to vector<8x32xf32>
    %119 = vector.shape_cast %109 : vector<8x32xf32> to vector<1x8x32xf32>
    tpu.vector_store %arg4[%116, %c0_34, %c0_35], %119 {strides = array<i32>} : memref<8x8x32xf32, #tpu.memory_space<vmem>>, vector<1x8x32xf32>,
    %c3_i32 = arith.constant 3 : i32
    %120 = arith.index_cast %c3_i32 : i32 to index
    %c0_36 = arith.constant 0 : index
    %c0_37 = arith.constant 0 : index
    %121 = vector.load %arg1[%120, %c0_36, %c0_37] : memref<8x8x128xf32, #tpu.memory_space<vmem>>, vector<1x8x128xf32>
    %122 = vector.shape_cast %121 : vector<1x8x128xf32> to vector<8x128xf32>
    %cst_38 = arith.constant dense<0.000000e+00> : vector<8x128xf32>
    %123 = tpu.matmul %111, %3, %cst_38 {dimension_numbers = #tpu.dot_dimension_numbers<[1], [0], [0], [1], [0, 0, 1, 1], [], []>} : vector<8x32xf32>, vector<32x128xf32>, vector<8x128xf32> -> vector<8x128xf32>
    %124 = arith.addf %122, %123 : vector<8x128xf32>
    %125 = vector.extract_strided_slice %124 {offsets = [0, 0], sizes = [8, 32], strides = [1, 1]} : vector<8x128xf32> to vector<8x32xf32>
    %126 = math.tanh %125 : vector<8x32xf32>
    %127 = vector.extract_strided_slice %124 {offsets = [0, 32], sizes = [8, 32], strides = [1, 1]} : vector<8x128xf32> to vector<8x32xf32>
    %128 = arith.negf %127 : vector<8x32xf32>
    %129 = math.exp %128 : vector<8x32xf32>
    %cst_39 = arith.constant 1.000000e+00 : f32
    %130 = vector.broadcast %cst_39 : f32 to vector<8x32xf32>
    %131 = arith.addf %130, %129 : vector<8x32xf32>
    %132 = arith.divf %130, %131 : vector<8x32xf32>
    %133 = vector.extract_strided_slice %124 {offsets = [0, 64], sizes = [8, 32], strides = [1, 1]} : vector<8x128xf32> to vector<8x32xf32>
    %134 = arith.negf %133 : vector<8x32xf32>
    %135 = math.exp %134 : vector<8x32xf32>
    %cst_40 = arith.constant 1.000000e+00 : f32
    %136 = vector.broadcast %cst_40 : f32 to vector<8x32xf32>
    %137 = arith.addf %136, %135 : vector<8x32xf32>
    %138 = arith.divf %136, %137 : vector<8x32xf32>
    %139 = vector.extract_strided_slice %124 {offsets = [0, 96], sizes = [8, 32], strides = [1, 1]} : vector<8x128xf32> to vector<8x32xf32>
    %140 = arith.negf %139 : vector<8x32xf32>
    %141 = math.exp %140 : vector<8x32xf32>
    %cst_41 = arith.constant 1.000000e+00 : f32
    %142 = vector.broadcast %cst_41 : f32 to vector<8x32xf32>
    %143 = arith.addf %142, %141 : vector<8x32xf32>
    %144 = arith.divf %142, %143 : vector<8x32xf32>
    %145 = arith.mulf %138, %109 : vector<8x32xf32>
    %146 = arith.mulf %132, %126 : vector<8x32xf32>
    %147 = arith.addf %145, %146 : vector<8x32xf32>
    %148 = math.tanh %147 : vector<8x32xf32>
    %149 = arith.mulf %144, %148 : vector<8x32xf32>
    %150 = arith.index_cast %c3_i32 : i32 to index
    %c0_42 = arith.constant 0 : index
    %c0_43 = arith.constant 0 : index
    %151 = vector.load %arg3[%150, %c0_42, %c0_43] : memref<8x8x32xf32, #tpu.memory_space<vmem>>, vector<1x8x32xf32>
    %152 = vector.shape_cast %151 : vector<1x8x32xf32> to vector<8x32xf32>
    %153 = vector.shape_cast %149 : vector<8x32xf32> to vector<1x8x32xf32>
    tpu.vector_store %arg3[%150, %c0_42, %c0_43], %153 {strides = array<i32>} : memref<8x8x32xf32, #tpu.memory_space<vmem>>, vector<1x8x32xf32>,
    %154 = arith.index_cast %c3_i32 : i32 to index
    %c0_44 = arith.constant 0 : index
    %c0_45 = arith.constant 0 : index
    %155 = vector.load %arg4[%154, %c0_44, %c0_45] : memref<8x8x32xf32, #tpu.memory_space<vmem>>, vector<1x8x32xf32>
    %156 = vector.shape_cast %155 : vector<1x8x32xf32> to vector<8x32xf32>
    %157 = vector.shape_cast %147 : vector<8x32xf32> to vector<1x8x32xf32>
    tpu.vector_store %arg4[%154, %c0_44, %c0_45], %157 {strides = array<i32>} : memref<8x8x32xf32, #tpu.memory_space<vmem>>, vector<1x8x32xf32>,
    %c4_i32 = arith.constant 4 : i32
    %158 = arith.index_cast %c4_i32 : i32 to index
    %c0_46 = arith.constant 0 : index
    %c0_47 = arith.constant 0 : index
    %159 = vector.load %arg1[%158, %c0_46, %c0_47] : memref<8x8x128xf32, #tpu.memory_space<vmem>>, vector<1x8x128xf32>
    %160 = vector.shape_cast %159 : vector<1x8x128xf32> to vector<8x128xf32>
    %cst_48 = arith.constant dense<0.000000e+00> : vector<8x128xf32>
    %161 = tpu.matmul %149, %3, %cst_48 {dimension_numbers = #tpu.dot_dimension_numbers<[1], [0], [0], [1], [0, 0, 1, 1], [], []>} : vector<8x32xf32>, vector<32x128xf32>, vector<8x128xf32> -> vector<8x128xf32>
    %162 = arith.addf %160, %161 : vector<8x128xf32>
    %163 = vector.extract_strided_slice %162 {offsets = [0, 0], sizes = [8, 32], strides = [1, 1]} : vector<8x128xf32> to vector<8x32xf32>
    %164 = math.tanh %163 : vector<8x32xf32>
    %165 = vector.extract_strided_slice %162 {offsets = [0, 32], sizes = [8, 32], strides = [1, 1]} : vector<8x128xf32> to vector<8x32xf32>
    %166 = arith.negf %165 : vector<8x32xf32>
    %167 = math.exp %166 : vector<8x32xf32>
    %cst_49 = arith.constant 1.000000e+00 : f32
    %168 = vector.broadcast %cst_49 : f32 to vector<8x32xf32>
    %169 = arith.addf %168, %167 : vector<8x32xf32>
    %170 = arith.divf %168, %169 : vector<8x32xf32>
    %171 = vector.extract_strided_slice %162 {offsets = [0, 64], sizes = [8, 32], strides = [1, 1]} : vector<8x128xf32> to vector<8x32xf32>
    %172 = arith.negf %171 : vector<8x32xf32>
    %173 = math.exp %172 : vector<8x32xf32>
    %cst_50 = arith.constant 1.000000e+00 : f32
    %174 = vector.broadcast %cst_50 : f32 to vector<8x32xf32>
    %175 = arith.addf %174, %173 : vector<8x32xf32>
    %176 = arith.divf %174, %175 : vector<8x32xf32>
    %177 = vector.extract_strided_slice %162 {offsets = [0, 96], sizes = [8, 32], strides = [1, 1]} : vector<8x128xf32> to vector<8x32xf32>
    %178 = arith.negf %177 : vector<8x32xf32>
    %179 = math.exp %178 : vector<8x32xf32>
    %cst_51 = arith.constant 1.000000e+00 : f32
    %180 = vector.broadcast %cst_51 : f32 to vector<8x32xf32>
    %181 = arith.addf %180, %179 : vector<8x32xf32>
    %182 = arith.divf %180, %181 : vector<8x32xf32>
    %183 = arith.mulf %176, %147 : vector<8x32xf32>
    %184 = arith.mulf %170, %164 : vector<8x32xf32>
    %185 = arith.addf %183, %184 : vector<8x32xf32>
    %186 = math.tanh %185 : vector<8x32xf32>
    %187 = arith.mulf %182, %186 : vector<8x32xf32>
    %188 = arith.index_cast %c4_i32 : i32 to index
    %c0_52 = arith.constant 0 : index
    %c0_53 = arith.constant 0 : index
    %189 = vector.load %arg3[%188, %c0_52, %c0_53] : memref<8x8x32xf32, #tpu.memory_space<vmem>>, vector<1x8x32xf32>
    %190 = vector.shape_cast %189 : vector<1x8x32xf32> to vector<8x32xf32>
    %191 = vector.shape_cast %187 : vector<8x32xf32> to vector<1x8x32xf32>
    tpu.vector_store %arg3[%188, %c0_52, %c0_53], %191 {strides = array<i32>} : memref<8x8x32xf32, #tpu.memory_space<vmem>>, vector<1x8x32xf32>,
    %192 = arith.index_cast %c4_i32 : i32 to index
    %c0_54 = arith.constant 0 : index
    %c0_55 = arith.constant 0 : index
    %193 = vector.load %arg4[%192, %c0_54, %c0_55] : memref<8x8x32xf32, #tpu.memory_space<vmem>>, vector<1x8x32xf32>
    %194 = vector.shape_cast %193 : vector<1x8x32xf32> to vector<8x32xf32>
    %195 = vector.shape_cast %185 : vector<8x32xf32> to vector<1x8x32xf32>
    tpu.vector_store %arg4[%192, %c0_54, %c0_55], %195 {strides = array<i32>} : memref<8x8x32xf32, #tpu.memory_space<vmem>>, vector<1x8x32xf32>,
    %c5_i32 = arith.constant 5 : i32
    %196 = arith.index_cast %c5_i32 : i32 to index
    %c0_56 = arith.constant 0 : index
    %c0_57 = arith.constant 0 : index
    %197 = vector.load %arg1[%196, %c0_56, %c0_57] : memref<8x8x128xf32, #tpu.memory_space<vmem>>, vector<1x8x128xf32>
    %198 = vector.shape_cast %197 : vector<1x8x128xf32> to vector<8x128xf32>
    %cst_58 = arith.constant dense<0.000000e+00> : vector<8x128xf32>
    %199 = tpu.matmul %187, %3, %cst_58 {dimension_numbers = #tpu.dot_dimension_numbers<[1], [0], [0], [1], [0, 0, 1, 1], [], []>} : vector<8x32xf32>, vector<32x128xf32>, vector<8x128xf32> -> vector<8x128xf32>
    %200 = arith.addf %198, %199 : vector<8x128xf32>
    %201 = vector.extract_strided_slice %200 {offsets = [0, 0], sizes = [8, 32], strides = [1, 1]} : vector<8x128xf32> to vector<8x32xf32>
    %202 = math.tanh %201 : vector<8x32xf32>
    %203 = vector.extract_strided_slice %200 {offsets = [0, 32], sizes = [8, 32], strides = [1, 1]} : vector<8x128xf32> to vector<8x32xf32>
    %204 = arith.negf %203 : vector<8x32xf32>
    %205 = math.exp %204 : vector<8x32xf32>
    %cst_59 = arith.constant 1.000000e+00 : f32
    %206 = vector.broadcast %cst_59 : f32 to vector<8x32xf32>
    %207 = arith.addf %206, %205 : vector<8x32xf32>
    %208 = arith.divf %206, %207 : vector<8x32xf32>
    %209 = vector.extract_strided_slice %200 {offsets = [0, 64], sizes = [8, 32], strides = [1, 1]} : vector<8x128xf32> to vector<8x32xf32>
    %210 = arith.negf %209 : vector<8x32xf32>
    %211 = math.exp %210 : vector<8x32xf32>
    %cst_60 = arith.constant 1.000000e+00 : f32
    %212 = vector.broadcast %cst_60 : f32 to vector<8x32xf32>
    %213 = arith.addf %212, %211 : vector<8x32xf32>
    %214 = arith.divf %212, %213 : vector<8x32xf32>
    %215 = vector.extract_strided_slice %200 {offsets = [0, 96], sizes = [8, 32], strides = [1, 1]} : vector<8x128xf32> to vector<8x32xf32>
    %216 = arith.negf %215 : vector<8x32xf32>
    %217 = math.exp %216 : vector<8x32xf32>
    %cst_61 = arith.constant 1.000000e+00 : f32
    %218 = vector.broadcast %cst_61 : f32 to vector<8x32xf32>
    %219 = arith.addf %218, %217 : vector<8x32xf32>
    %220 = arith.divf %218, %219 : vector<8x32xf32>
    %221 = arith.mulf %214, %185 : vector<8x32xf32>
    %222 = arith.mulf %208, %202 : vector<8x32xf32>
    %223 = arith.addf %221, %222 : vector<8x32xf32>
    %224 = math.tanh %223 : vector<8x32xf32>
    %225 = arith.mulf %220, %224 : vector<8x32xf32>
    %226 = arith.index_cast %c5_i32 : i32 to index
    %c0_62 = arith.constant 0 : index
    %c0_63 = arith.constant 0 : index
    %227 = vector.load %arg3[%226, %c0_62, %c0_63] : memref<8x8x32xf32, #tpu.memory_space<vmem>>, vector<1x8x32xf32>
    %228 = vector.shape_cast %227 : vector<1x8x32xf32> to vector<8x32xf32>
    %229 = vector.shape_cast %225 : vector<8x32xf32> to vector<1x8x32xf32>
    tpu.vector_store %arg3[%226, %c0_62, %c0_63], %229 {strides = array<i32>} : memref<8x8x32xf32, #tpu.memory_space<vmem>>, vector<1x8x32xf32>,
    %230 = arith.index_cast %c5_i32 : i32 to index
    %c0_64 = arith.constant 0 : index
    %c0_65 = arith.constant 0 : index
    %231 = vector.load %arg4[%230, %c0_64, %c0_65] : memref<8x8x32xf32, #tpu.memory_space<vmem>>, vector<1x8x32xf32>
    %232 = vector.shape_cast %231 : vector<1x8x32xf32> to vector<8x32xf32>
    %233 = vector.shape_cast %223 : vector<8x32xf32> to vector<1x8x32xf32>
    tpu.vector_store %arg4[%230, %c0_64, %c0_65], %233 {strides = array<i32>} : memref<8x8x32xf32, #tpu.memory_space<vmem>>, vector<1x8x32xf32>,
    %c6_i32 = arith.constant 6 : i32
    %234 = arith.index_cast %c6_i32 : i32 to index
    %c0_66 = arith.constant 0 : index
    %c0_67 = arith.constant 0 : index
    %235 = vector.load %arg1[%234, %c0_66, %c0_67] : memref<8x8x128xf32, #tpu.memory_space<vmem>>, vector<1x8x128xf32>
    %236 = vector.shape_cast %235 : vector<1x8x128xf32> to vector<8x128xf32>
    %cst_68 = arith.constant dense<0.000000e+00> : vector<8x128xf32>
    %237 = tpu.matmul %225, %3, %cst_68 {dimension_numbers = #tpu.dot_dimension_numbers<[1], [0], [0], [1], [0, 0, 1, 1], [], []>} : vector<8x32xf32>, vector<32x128xf32>, vector<8x128xf32> -> vector<8x128xf32>
    %238 = arith.addf %236, %237 : vector<8x128xf32>
    %239 = vector.extract_strided_slice %238 {offsets = [0, 0], sizes = [8, 32], strides = [1, 1]} : vector<8x128xf32> to vector<8x32xf32>
    %240 = math.tanh %239 : vector<8x32xf32>
    %241 = vector.extract_strided_slice %238 {offsets = [0, 32], sizes = [8, 32], strides = [1, 1]} : vector<8x128xf32> to vector<8x32xf32>
    %242 = arith.negf %241 : vector<8x32xf32>
    %243 = math.exp %242 : vector<8x32xf32>
    %cst_69 = arith.constant 1.000000e+00 : f32
    %244 = vector.broadcast %cst_69 : f32 to vector<8x32xf32>
    %245 = arith.addf %244, %243 : vector<8x32xf32>
    %246 = arith.divf %244, %245 : vector<8x32xf32>
    %247 = vector.extract_strided_slice %238 {offsets = [0, 64], sizes = [8, 32], strides = [1, 1]} : vector<8x128xf32> to vector<8x32xf32>
    %248 = arith.negf %247 : vector<8x32xf32>
    %249 = math.exp %248 : vector<8x32xf32>
    %cst_70 = arith.constant 1.000000e+00 : f32
    %250 = vector.broadcast %cst_70 : f32 to vector<8x32xf32>
    %251 = arith.addf %250, %249 : vector<8x32xf32>
    %252 = arith.divf %250, %251 : vector<8x32xf32>
    %253 = vector.extract_strided_slice %238 {offsets = [0, 96], sizes = [8, 32], strides = [1, 1]} : vector<8x128xf32> to vector<8x32xf32>
    %254 = arith.negf %253 : vector<8x32xf32>
    %255 = math.exp %254 : vector<8x32xf32>
    %cst_71 = arith.constant 1.000000e+00 : f32
    %256 = vector.broadcast %cst_71 : f32 to vector<8x32xf32>
    %257 = arith.addf %256, %255 : vector<8x32xf32>
    %258 = arith.divf %256, %257 : vector<8x32xf32>
    %259 = arith.mulf %252, %223 : vector<8x32xf32>
    %260 = arith.mulf %246, %240 : vector<8x32xf32>
    %261 = arith.addf %259, %260 : vector<8x32xf32>
    %262 = math.tanh %261 : vector<8x32xf32>
    %263 = arith.mulf %258, %262 : vector<8x32xf32>
    %264 = arith.index_cast %c6_i32 : i32 to index
    %c0_72 = arith.constant 0 : index
    %c0_73 = arith.constant 0 : index
    %265 = vector.load %arg3[%264, %c0_72, %c0_73] : memref<8x8x32xf32, #tpu.memory_space<vmem>>, vector<1x8x32xf32>
    %266 = vector.shape_cast %265 : vector<1x8x32xf32> to vector<8x32xf32>
    %267 = vector.shape_cast %263 : vector<8x32xf32> to vector<1x8x32xf32>
    tpu.vector_store %arg3[%264, %c0_72, %c0_73], %267 {strides = array<i32>} : memref<8x8x32xf32, #tpu.memory_space<vmem>>, vector<1x8x32xf32>,
    %268 = arith.index_cast %c6_i32 : i32 to index
    %c0_74 = arith.constant 0 : index
    %c0_75 = arith.constant 0 : index
    %269 = vector.load %arg4[%268, %c0_74, %c0_75] : memref<8x8x32xf32, #tpu.memory_space<vmem>>, vector<1x8x32xf32>
    %270 = vector.shape_cast %269 : vector<1x8x32xf32> to vector<8x32xf32>
    %271 = vector.shape_cast %261 : vector<8x32xf32> to vector<1x8x32xf32>
    tpu.vector_store %arg4[%268, %c0_74, %c0_75], %271 {strides = array<i32>} : memref<8x8x32xf32, #tpu.memory_space<vmem>>, vector<1x8x32xf32>,
    %c7_i32 = arith.constant 7 : i32
    %272 = arith.index_cast %c7_i32 : i32 to index
    %c0_76 = arith.constant 0 : index
    %c0_77 = arith.constant 0 : index
    %273 = vector.load %arg1[%272, %c0_76, %c0_77] : memref<8x8x128xf32, #tpu.memory_space<vmem>>, vector<1x8x128xf32>
    %274 = vector.shape_cast %273 : vector<1x8x128xf32> to vector<8x128xf32>
    %cst_78 = arith.constant dense<0.000000e+00> : vector<8x128xf32>
    %275 = tpu.matmul %263, %3, %cst_78 {dimension_numbers = #tpu.dot_dimension_numbers<[1], [0], [0], [1], [0, 0, 1, 1], [], []>} : vector<8x32xf32>, vector<32x128xf32>, vector<8x128xf32> -> vector<8x128xf32>
    %276 = arith.addf %274, %275 : vector<8x128xf32>
    %277 = vector.extract_strided_slice %276 {offsets = [0, 0], sizes = [8, 32], strides = [1, 1]} : vector<8x128xf32> to vector<8x32xf32>
    %278 = math.tanh %277 : vector<8x32xf32>
    %279 = vector.extract_strided_slice %276 {offsets = [0, 32], sizes = [8, 32], strides = [1, 1]} : vector<8x128xf32> to vector<8x32xf32>
    %280 = arith.negf %279 : vector<8x32xf32>
    %281 = math.exp %280 : vector<8x32xf32>
    %cst_79 = arith.constant 1.000000e+00 : f32
    %282 = vector.broadcast %cst_79 : f32 to vector<8x32xf32>
    %283 = arith.addf %282, %281 : vector<8x32xf32>
    %284 = arith.divf %282, %283 : vector<8x32xf32>
    %285 = vector.extract_strided_slice %276 {offsets = [0, 64], sizes = [8, 32], strides = [1, 1]} : vector<8x128xf32> to vector<8x32xf32>
    %286 = arith.negf %285 : vector<8x32xf32>
    %287 = math.exp %286 : vector<8x32xf32>
    %cst_80 = arith.constant 1.000000e+00 : f32
    %288 = vector.broadcast %cst_80 : f32 to vector<8x32xf32>
    %289 = arith.addf %288, %287 : vector<8x32xf32>
    %290 = arith.divf %288, %289 : vector<8x32xf32>
    %291 = vector.extract_strided_slice %276 {offsets = [0, 96], sizes = [8, 32], strides = [1, 1]} : vector<8x128xf32> to vector<8x32xf32>
    %292 = arith.negf %291 : vector<8x32xf32>
    %293 = math.exp %292 : vector<8x32xf32>
    %cst_81 = arith.constant 1.000000e+00 : f32
    %294 = vector.broadcast %cst_81 : f32 to vector<8x32xf32>
    %295 = arith.addf %294, %293 : vector<8x32xf32>
    %296 = arith.divf %294, %295 : vector<8x32xf32>
    %297 = arith.mulf %290, %261 : vector<8x32xf32>
    %298 = arith.mulf %284, %278 : vector<8x32xf32>
    %299 = arith.addf %297, %298 : vector<8x32xf32>
    %300 = math.tanh %299 : vector<8x32xf32>
    %301 = arith.mulf %296, %300 : vector<8x32xf32>
    %302 = arith.index_cast %c7_i32 : i32 to index
    %c0_82 = arith.constant 0 : index
    %c0_83 = arith.constant 0 : index
    %303 = vector.load %arg3[%302, %c0_82, %c0_83] : memref<8x8x32xf32, #tpu.memory_space<vmem>>, vector<1x8x32xf32>
    %304 = vector.shape_cast %303 : vector<1x8x32xf32> to vector<8x32xf32>
    %305 = vector.shape_cast %301 : vector<8x32xf32> to vector<1x8x32xf32>
    tpu.vector_store %arg3[%302, %c0_82, %c0_83], %305 {strides = array<i32>} : memref<8x8x32xf32, #tpu.memory_space<vmem>>, vector<1x8x32xf32>,
    %306 = arith.index_cast %c7_i32 : i32 to index
    %c0_84 = arith.constant 0 : index
    %c0_85 = arith.constant 0 : index
    %307 = vector.load %arg4[%306, %c0_84, %c0_85] : memref<8x8x32xf32, #tpu.memory_space<vmem>>, vector<1x8x32xf32>
    %308 = vector.shape_cast %307 : vector<1x8x32xf32> to vector<8x32xf32>
    %309 = vector.shape_cast %299 : vector<8x32xf32> to vector<1x8x32xf32>
    tpu.vector_store %arg4[%306, %c0_84, %c0_85], %309 {strides = array<i32>} : memref<8x8x32xf32, #tpu.memory_space<vmem>>, vector<1x8x32xf32>,
    %c8_i32 = arith.constant 8 : i32
    %c0_86 = arith.constant 0 : index
    %c0_87 = arith.constant 0 : index
    %310 = vector.load %arg5[%c0_86, %c0_87] : memref<8x32xf32, #tpu.memory_space<vmem>>, vector<8x32xf32>
    tpu.vector_store %arg5[%c0_86, %c0_87], %301 {strides = array<i32>} : memref<8x32xf32, #tpu.memory_space<vmem>>, vector<8x32xf32>,
    %c0_88 = arith.constant 0 : index
    %c0_89 = arith.constant 0 : index
    %311 = vector.load %arg6[%c0_88, %c0_89] : memref<8x32xf32, #tpu.memory_space<vmem>>, vector<8x32xf32>
    tpu.vector_store %arg6[%c0_88, %c0_89], %299 {strides = array<i32>} : memref<8x32xf32, #tpu.memory_space<vmem>>, vector<8x32xf32>,
    return
  }
  func.func @transform_0(%arg0: i32) -> (i32, i32, i32) {
    %c0_i32 = arith.constant 0 : i32
    %c0_i32_0 = arith.constant 0 : i32
    %c0_i32_1 = arith.constant 0 : i32
    return %arg0, %c0_i32, %c0_i32_0 : i32, i32, i32
  }
  func.func @transform_1(%arg0: i32) -> (i32, i32) {
    %c0_i32 = arith.constant 0 : i32
    %c0_i32_0 = arith.constant 0 : i32
    %c0_i32_1 = arith.constant 0 : i32
    return %c0_i32, %c0_i32_0 : i32, i32
  }
  func.func @transform_2(%arg0: i32) -> (i32, i32, i32) {
    %c0_i32 = arith.constant 0 : i32
    %c0_i32_0 = arith.constant 0 : i32
    %c0_i32_1 = arith.constant 0 : i32
    return %arg0, %c0_i32, %c0_i32_0 : i32, i32, i32
  }
  func.func @transform_3(%arg0: i32) -> (i32, i32, i32) {
    %c0_i32 = arith.constant 0 : i32
    %c0_i32_0 = arith.constant 0 : i32
    %c0_i32_1 = arith.constant 0 : i32
    return %arg0, %c0_i32, %c0_i32_0 : i32, i32, i32
  }
}

</mosaic_0001>

<llo_original>
// kernel: lstm_forward.1
$region0: #{lstm_forward.1}
  #allocation0 [shape = 'u32[]', space=smem, size = 0x4, offset = 0x4, fixed_abs, tag = 'smem constant byte address 0x4 - core index']
  #allocation1 [shape = 'u32[144,128]{1,0:T(1,128)}', space=vmem, size = 0x12000, scoped, tag = 'internal scratch']
  #allocation2 [shape = 'f32[8,32]{1,0:T(8,128)}', space=vmem, size = 0x1000, scoped, tag = 'scratch operand']
  #allocation3 [shape = 'f32[8,32]{1,0:T(8,128)}', space=vmem, size = 0x1000, scoped, tag = 'scratch operand']
  %s0 = inlined_call_operand.vmem [shape: f32[8,8,128], index: 0, kind: input, shape index: {}]
  %s1 = inlined_call_operand.vmem [shape: f32[32,128], index: 1, kind: input, shape index: {}]
  %s2 = inlined_call_operand.hbm [shape: f32[8,8,32], index: 2, kind: output, shape index: {0}]
  %s3 = inlined_call_operand.hbm [shape: f32[8,8,32], index: 3, kind: output, shape index: {1}]
  %4 = xla_tuple %s2, %s3
  %s5 = sld [smem:[#allocation0]]
  $region30: #{lstm_forward.1} parent=0
    _
  %s7 = ssub.s32 1, %s5
  %s8 = scalar_select 0, %s7, %s5
  $region1: #{lstm_forward.1} parent=0
    #allocation4 [shape = 'u8[32768]{0}', space=vmem, size = 0x8000, scoped, tag = 'output window, operand 0, single buffered']
    #allocation5 [shape = 's32[1]{0}', space=sflag, size = 0x4, scoped, tag = 'scoped memory for lstm_forward.1']
    #allocation6 [shape = 'u8[32768]{0}', space=vmem, size = 0x8000, scoped, tag = 'output window, operand 1, single buffered']
    #allocation7 [shape = 's32[1]{0}', space=sflag, size = 0x4, scoped, tag = 'scoped memory for lstm_forward.1']
    %9 = vsyncpa [#allocation5], 0
    %10 = vsyncpa [#allocation7], 0
    // Predicated region
    $region2: #{lstm_forward.1} parent=1 // pred_check
      _
    $region3: #{lstm_forward.1} parent=1 // pred_check_branch
      %12 = sbr.rel (0) target = $region5
    $region4: #{lstm_forward.1} parent=1 // pred_region
      _
    $region5: #{lstm_forward.1} parent=1 // pred_fallthru
      _
    // Predicated region
    $region6: #{lstm_forward.1} parent=1 // pred_check
      _
    $region7: #{lstm_forward.1} parent=1 // pred_check_branch
      %14 = sbr.rel (0) target = $region9
    $region8: #{lstm_forward.1} parent=1 // pred_region
      _
    $region9: #{lstm_forward.1} parent=1 // pred_fallthru
      _
    %p15 = scmp.eq.s32.totalorder 0, 0
    // Predicated region
    $region10: #{lstm_forward.1} parent=1 // pred_check
      %p16 = pneg %p15
    $region11: #{lstm_forward.1} parent=1 // pred_check_branch
      %18 = sbr.rel (%p16) target = $region13
    $region12: #{lstm_forward.1} parent=1 // pred_region
      %vm19 = vcmask 261120
      %20 = vst.msk [vmem:[#allocation2] sm:$0xff] %vm19, 0.0
      %21 = vst.msk [vmem:[#allocation3] sm:$0xff] %vm19, 0.0
    $region13: #{lstm_forward.1} parent=1 // pred_fallthru
      _
    %v22 = vld [vmem:[%s1] sm:$0xff]
    %v23 = vld [vmem:[%s1 + $0x8] sm:$0xff]
    %v24 = vld [vmem:[%s1 + $0x10] sm:$0xff]
    %v25 = vld [vmem:[%s1 + $0x18] sm:$0xff]
    %v26 = vld [vmem:[#allocation2] sm:$0xff]
    %v27 = vld [vmem:[#allocation3] sm:$0xff]
    %v28 = vld [vmem:[%s0] sm:$0xff]
    %vm29 = vcmask 261120
    %v31 = vsel %vm29, %v26, 0
    %33 = vmatprep.subr.mxu0 0.0
    %34 = vmatpush1.msra.mxu0 %v22
    %35 = vmatprep.subr.mxu0 0.0
    %36 = vmatpush1.msra.mxu0 %v23
    %37 = vmatprep.subr.mxu0 0.0
    %38 = vmatpush1.msra.mxu0 %v24
    %39 = vmatprep.subr.mxu0 0.0
    %40 = vmatpush1.msra.mxu0 %v25
    %41 = vmatprep.subr.mxu0 0.0
    %42 = vmatpush1.msra.mxu0 0.0
    %43 = vmatprep.subr.mxu0 0.0
    %44 = vmatpush1.msra.mxu0 0.0
    %45 = vmatprep.subr.mxu0 0.0
    %46 = vmatpush1.msra.mxu0 0.0
    %47 = vmatprep.subr.mxu0 0.0
    %48 = vmatpush1.msra.mxu0 0.0
    %49 = vmatprep.subr.mxu0 0.0
    %50 = vmatpush1.msra.mxu0 0.0
    %51 = vmatprep.subr.mxu0 0.0
    %52 = vmatpush1.msra.mxu0 0.0
    %53 = vmatprep.subr.mxu0 0.0
    %54 = vmatpush1.msra.mxu0 0.0
    %55 = vmatprep.subr.mxu0 0.0
    %56 = vmatpush1.msra.mxu0 0.0
    %57 = vmatprep.subr.mxu0 0.0
    %58 = vmatpush1.msra.mxu0 0.0
    %59 = vmatprep.subr.mxu0 0.0
    %60 = vmatpush1.msra.mxu0 0.0
    %61 = vmatprep.subr.mxu0 0.0
    %62 = vmatpush1.msra.mxu0 0.0
    %63 = vmatprep.subr.mxu0 0.0
    %64 = vmatpush1.msra.mxu0 0.0
    %65 = vmatprep.subr.mxu0 0.0
    %66 = vmatpush1.msra.mxu0 0.0
    %67 = vmatprep.subr.mxu0 0.0
    %68 = vmatpush1.msra.mxu0 0.0
    %69 = vmatprep.subr.mxu0 0.0
    %70 = vmatpush1.msra.mxu0 0.0
    %71 = vmatprep.subr.mxu0 0.0
    %72 = vmatpush1.msra.mxu0 0.0
    %73 = vmatprep.subr.mxu0 0.0
    %74 = vmatpush1.msra.mxu0 0.0
    %75 = vmatprep.subr.mxu0 0.0
    %76 = vmatpush1.msra.mxu0 0.0
    %77 = vmatprep.subr.mxu0 0.0
    %78 = vmatpush1.msra.mxu0 0.0
    %79 = vmatprep.subr.mxu0 0.0
    %80 = vmatpush1.msra.mxu0 0.0
    %81 = vmatprep.subr.mxu0 0.0
    %82 = vmatpush1.msra.mxu0 0.0
    %83 = vmatprep.subr.mxu0 0.0
    %84 = vmatpush1.msra.mxu0 0.0
    %85 = vmatprep.subr.mxu0 0.0
    %86 = vmatpush1.msra.mxu0 0.0
    %87 = vmatprep.subr.mxu0 0.0
    %88 = vmatpush1.msra.mxu0 0.0
    %89 = vmatprep.subr.mxu0 0.0
    %90 = vmatpush1.msra.mxu0 0.0
    %91 = vmatprep.subr.mxu0 0.0
    %92 = vmatpush1.msra.mxu0 0.0
    %93 = vmatprep.subr.mxu0 0.0
    %94 = vmatpush1.msra.mxu0 0.0
    %95 = vmatprep.subr.mxu0 0.0
    %96 = vmatpush1.msra.mxu0 0.0
    %97 = vmatprep.mubr.f32.mxu0 0.0
    %98 = vmatmul.mubr.f32.gmra.mrb[0].mxu0 %v31
    %v99 = vpop.f32.mrb[0].mxu0
    %v100 = vadd.f32 0.0, %v99
    %v101 = vpop.f32.mrb[0].mxu0
    %102 = vdwg.mxu0
    %v103 = vadd.f32 %v28, %v100
    %v104 = vtanh.pop %v103
    %v105 = vxor.u32 %v103, 2147483648
    %v106 = vmul.f32 %v105, 1.442695
    %v107 = vpow.pop %v106
    %v108 = vadd.f32 %v107, 1.0
    %v109 = vrcp.pop %v108
    %v110 = vmul.f32 1.0, %v109
    %112 = vrot.lane.b32.xlu0 %v27, 64
    %v113 = vpop.permute.xlu0 %112
    %v115 = vmul.f32 %v110, %v113
    %117 = vrot.lane.b32.xlu0 %v104, 32
    %v118 = vpop.permute.xlu0 %117
    %v120 = vmul.f32 %v110, %v118
    %122 = vrot.lane.b32.xlu0 %v120, 32
    %v123 = vpop.permute.xlu0 %122
    %v125 = vadd.f32 %v115, %v123
    %v126 = vtanh.pop %v125
    %128 = vrot.lane.b32.xlu0 %v126, 32
    %v129 = vpop.permute.xlu0 %128
    %v131 = vmul.f32 %v110, %v129
    %133 = vrot.lane.b32.xlu0 %v131, 32
    %v134 = vpop.permute.xlu0 %133
    %136 = vst.msk [vmem:[#allocation4] sm:$0xff] %vm29, %v134
    %138 = vrot.lane.b32.xlu0 %v125, 64
    %v139 = vpop.permute.xlu0 %138
    %141 = vst.msk [vmem:[#allocation6] sm:$0xff] %vm29, %v139
    %s142 = scalar_lea.vmem %s0, 8
    %v143 = vld [vmem:[%s142] sm:$0xff]
    %v144 = vsel %vm29, %v134, 0
    %146 = vmatprep.subr.mxu0 0.0
    %147 = vmatpush1.msra.mxu0 %v22
    %148 = vmatprep.subr.mxu0 0.0
    %149 = vmatpush1.msra.mxu0 %v23
    %150 = vmatprep.subr.mxu0 0.0
    %151 = vmatpush1.msra.mxu0 %v24
    %152 = vmatprep.subr.mxu0 0.0
    %153 = vmatpush1.msra.mxu0 %v25
    %154 = vmatprep.subr.mxu0 0.0
    %155 = vmatpush1.msra.mxu0 0.0
    %156 = vmatprep.subr.mxu0 0.0
    %157 = vmatpush1.msra.mxu0 0.0
    %158 = vmatprep.subr.mxu0 0.0
    %159 = vmatpush1.msra.mxu0 0.0
    %160 = vmatprep.subr.mxu0 0.0
    %161 = vmatpush1.msra.mxu0 0.0
    %162 = vmatprep.subr.mxu0 0.0
    %163 = vmatpush1.msra.mxu0 0.0
    %164 = vmatprep.subr.mxu0 0.0
    %165 = vmatpush1.msra.mxu0 0.0
    %166 = vmatprep.subr.mxu0 0.0
    %167 = vmatpush1.msra.mxu0 0.0
    %168 = vmatprep.subr.mxu0 0.0
    %169 = vmatpush1.msra.mxu0 0.0
    %170 = vmatprep.subr.mxu0 0.0
    %171 = vmatpush1.msra.mxu0 0.0
    %172 = vmatprep.subr.mxu0 0.0
    %173 = vmatpush1.msra.mxu0 0.0
    %174 = vmatprep.subr.mxu0 0.0
    %175 = vmatpush1.msra.mxu0 0.0
    %176 = vmatprep.subr.mxu0 0.0
    %177 = vmatpush1.msra.mxu0 0.0
    %178 = vmatprep.subr.mxu0 0.0
    %179 = vmatpush1.msra.mxu0 0.0
    %180 = vmatprep.subr.mxu0 0.0
    %181 = vmatpush1.msra.mxu0 0.0
    %182 = vmatprep.subr.mxu0 0.0
    %183 = vmatpush1.msra.mxu0 0.0
    %184 = vmatprep.subr.mxu0 0.0
    %185 = vmatpush1.msra.mxu0 0.0
    %186 = vmatprep.subr.mxu0 0.0
    %187 = vmatpush1.msra.mxu0 0.0
    %188 = vmatprep.subr.mxu0 0.0
    %189 = vmatpush1.msra.mxu0 0.0
    %190 = vmatprep.subr.mxu0 0.0
    %191 = vmatpush1.msra.mxu0 0.0
    %192 = vmatprep.subr.mxu0 0.0
    %193 = vmatpush1.msra.mxu0 0.0
    %194 = vmatprep.subr.mxu0 0.0
    %195 = vmatpush1.msra.mxu0 0.0
    %196 = vmatprep.subr.mxu0 0.0
    %197 = vmatpush1.msra.mxu0 0.0
    %198 = vmatprep.subr.mxu0 0.0
    %199 = vmatpush1.msra.mxu0 0.0
    %200 = vmatprep.subr.mxu0 0.0
    %201 = vmatpush1.msra.mxu0 0.0
    %202 = vmatprep.subr.mxu0 0.0
    %203 = vmatpush1.msra.mxu0 0.0
    %204 = vmatprep.subr.mxu0 0.0
    %205 = vmatpush1.msra.mxu0 0.0
    %206 = vmatprep.subr.mxu0 0.0
    %207 = vmatpush1.msra.mxu0 0.0
    %208 = vmatprep.subr.mxu0 0.0
    %209 = vmatpush1.msra.mxu0 0.0
    %210 = vmatprep.mubr.f32.mxu0 0.0
    %211 = vmatmul.mubr.f32.gmra.mrb[0].mxu0 %v144
    %v212 = vpop.f32.mrb[0].mxu0
    %v213 = vadd.f32 0.0, %v212
    %v214 = vpop.f32.mrb[0].mxu0
    %215 = vdwg.mxu0
    %v216 = vadd.f32 %v143, %v213
    %v217 = vtanh.pop %v216
    %v218 = vxor.u32 %v216, 2147483648
    %v219 = vmul.f32 %v218, 1.442695
    %v220 = vpow.pop %v219
    %v221 = vadd.f32 %v220, 1.0
    %v222 = vrcp.pop %v221
    %v223 = vmul.f32 1.0, %v222
    %v224 = vmul.f32 %v223, %v125
    %226 = vrot.lane.b32.xlu0 %v217, 32
    %v227 = vpop.permute.xlu0 %226
    %v229 = vmul.f32 %v223, %v227
    %231 = vrot.lane.b32.xlu0 %v229, 32
    %v232 = vpop.permute.xlu0 %231
    %v234 = vadd.f32 %v224, %v232
    %v235 = vtanh.pop %v234
    %237 = vrot.lane.b32.xlu0 %v235, 32
    %v238 = vpop.permute.xlu0 %237
    %v240 = vmul.f32 %v223, %v238
    %242 = vrot.lane.b32.xlu0 %v240, 32
    %v243 = vpop.permute.xlu0 %242
    %s245 = scalar_lea.vmem [#allocation4], 8
    %246 = vst.msk [vmem:[%s245] sm:$0xff] %vm29, %v243
    %248 = vrot.lane.b32.xlu0 %v234, 64
    %v249 = vpop.permute.xlu0 %248
    %s251 = scalar_lea.vmem [#allocation6], 8
    %252 = vst.msk [vmem:[%s251] sm:$0xff] %vm29, %v249
    %s253 = scalar_lea.vmem %s0, 16
    %v254 = vld [vmem:[%s253] sm:$0xff]
    %v255 = vsel %vm29, %v243, 0
    %257 = vmatprep.subr.mxu0 0.0
    %258 = vmatpush1.msra.mxu0 %v22
    %259 = vmatprep.subr.mxu0 0.0
    %260 = vmatpush1.msra.mxu0 %v23
    %261 = vmatprep.subr.mxu0 0.0
    %262 = vmatpush1.msra.mxu0 %v24
    %263 = vmatprep.subr.mxu0 0.0
    %264 = vmatpush1.msra.mxu0 %v25
    %265 = vmatprep.subr.mxu0 0.0
    %266 = vmatpush1.msra.mxu0 0.0
    %267 = vmatprep.subr.mxu0 0.0
    %268 = vmatpush1.msra.mxu0 0.0
    %269 = vmatprep.subr.mxu0 0.0
    %270 = vmatpush1.msra.mxu0 0.0
    %271 = vmatprep.subr.mxu0 0.0
    %272 = vmatpush1.msra.mxu0 0.0
    %273 = vmatprep.subr.mxu0 0.0
    %274 = vmatpush1.msra.mxu0 0.0
    %275 = vmatprep.subr.mxu0 0.0
    %276 = vmatpush1.msra.mxu0 0.0
    %277 = vmatprep.subr.mxu0 0.0
    %278 = vmatpush1.msra.mxu0 0.0
    %279 = vmatprep.subr.mxu0 0.0
    %280 = vmatpush1.msra.mxu0 0.0
    %281 = vmatprep.subr.mxu0 0.0
    %282 = vmatpush1.msra.mxu0 0.0
    %283 = vmatprep.subr.mxu0 0.0
    %284 = vmatpush1.msra.mxu0 0.0
    %285 = vmatprep.subr.mxu0 0.0
    %286 = vmatpush1.msra.mxu0 0.0
    %287 = vmatprep.subr.mxu0 0.0
    %288 = vmatpush1.msra.mxu0 0.0
    %289 = vmatprep.subr.mxu0 0.0
    %290 = vmatpush1.msra.mxu0 0.0
    %291 = vmatprep.subr.mxu0 0.0
    %292 = vmatpush1.msra.mxu0 0.0
    %293 = vmatprep.subr.mxu0 0.0
    %294 = vmatpush1.msra.mxu0 0.0
    %295 = vmatprep.subr.mxu0 0.0
    %296 = vmatpush1.msra.mxu0 0.0
    %297 = vmatprep.subr.mxu0 0.0
    %298 = vmatpush1.msra.mxu0 0.0
    %299 = vmatprep.subr.mxu0 0.0
    %300 = vmatpush1.msra.mxu0 0.0
    %301 = vmatprep.subr.mxu0 0.0
    %302 = vmatpush1.msra.mxu0 0.0
    %303 = vmatprep.subr.mxu0 0.0
    %304 = vmatpush1.msra.mxu0 0.0
    %305 = vmatprep.subr.mxu0 0.0
    %306 = vmatpush1.msra.mxu0 0.0
    %307 = vmatprep.subr.mxu0 0.0
    %308 = vmatpush1.msra.mxu0 0.0
    %309 = vmatprep.subr.mxu0 0.0
    %310 = vmatpush1.msra.mxu0 0.0
    %311 = vmatprep.subr.mxu0 0.0
    %312 = vmatpush1.msra.mxu0 0.0
    %313 = vmatprep.subr.mxu0 0.0
    %314 = vmatpush1.msra.mxu0 0.0
    %315 = vmatprep.subr.mxu0 0.0
    %316 = vmatpush1.msra.mxu0 0.0
    %317 = vmatprep.subr.mxu0 0.0
    %318 = vmatpush1.msra.mxu0 0.0
    %319 = vmatprep.subr.mxu0 0.0
    %320 = vmatpush1.msra.mxu0 0.0
    %321 = vmatprep.mubr.f32.mxu0 0.0
    %322 = vmatmul.mubr.f32.gmra.mrb[0].mxu0 %v255
    %v323 = vpop.f32.mrb[0].mxu0
    %v324 = vadd.f32 0.0, %v323
    %v325 = vpop.f32.mrb[0].mxu0
    %326 = vdwg.mxu0
    %v327 = vadd.f32 %v254, %v324
    %v328 = vtanh.pop %v327
    %v329 = vxor.u32 %v327, 2147483648
    %v330 = vmul.f32 %v329, 1.442695
    %v331 = vpow.pop %v330
    %v332 = vadd.f32 %v331, 1.0
    %v333 = vrcp.pop %v332
    %v334 = vmul.f32 1.0, %v333
    %v335 = vmul.f32 %v334, %v234
    %337 = vrot.lane.b32.xlu0 %v328, 32
    %v338 = vpop.permute.xlu0 %337
    %v340 = vmul.f32 %v334, %v338
    %342 = vrot.lane.b32.xlu0 %v340, 32
    %v343 = vpop.permute.xlu0 %342
    %v345 = vadd.f32 %v335, %v343
    %v346 = vtanh.pop %v345
    %348 = vrot.lane.b32.xlu0 %v346, 32
    %v349 = vpop.permute.xlu0 %348
    %v351 = vmul.f32 %v334, %v349
    %353 = vrot.lane.b32.xlu0 %v351, 32
    %v354 = vpop.permute.xlu0 %353
    %s356 = scalar_lea.vmem [#allocation4], 16
    %357 = vst.msk [vmem:[%s356] sm:$0xff] %vm29, %v354
    %359 = vrot.lane.b32.xlu0 %v345, 64
    %v360 = vpop.permute.xlu0 %359
    %s362 = scalar_lea.vmem [#allocation6], 16
    %363 = vst.msk [vmem:[%s362] sm:$0xff] %vm29, %v360
    %s364 = scalar_lea.vmem %s0, 24
    %v365 = vld [vmem:[%s364] sm:$0xff]
    %v366 = vsel %vm29, %v354, 0
    %368 = vmatprep.subr.mxu0 0.0
    %369 = vmatpush1.msra.mxu0 %v22
    %370 = vmatprep.subr.mxu0 0.0
    %371 = vmatpush1.msra.mxu0 %v23
    %372 = vmatprep.subr.mxu0 0.0
    %373 = vmatpush1.msra.mxu0 %v24
    %374 = vmatprep.subr.mxu0 0.0
    %375 = vmatpush1.msra.mxu0 %v25
    %376 = vmatprep.subr.mxu0 0.0
    %377 = vmatpush1.msra.mxu0 0.0
    %378 = vmatprep.subr.mxu0 0.0
    %379 = vmatpush1.msra.mxu0 0.0
    %380 = vmatprep.subr.mxu0 0.0
    %381 = vmatpush1.msra.mxu0 0.0
    %382 = vmatprep.subr.mxu0 0.0
    %383 = vmatpush1.msra.mxu0 0.0
    %384 = vmatprep.subr.mxu0 0.0
    %385 = vmatpush1.msra.mxu0 0.0
    %386 = vmatprep.subr.mxu0 0.0
    %387 = vmatpush1.msra.mxu0 0.0
    %388 = vmatprep.subr.mxu0 0.0
    %389 = vmatpush1.msra.mxu0 0.0
    %390 = vmatprep.subr.mxu0 0.0
    %391 = vmatpush1.msra.mxu0 0.0
    %392 = vmatprep.subr.mxu0 0.0
    %393 = vmatpush1.msra.mxu0 0.0
    %394 = vmatprep.subr.mxu0 0.0
    %395 = vmatpush1.msra.mxu0 0.0
    %396 = vmatprep.subr.mxu0 0.0
    %397 = vmatpush1.msra.mxu0 0.0
    %398 = vmatprep.subr.mxu0 0.0
    %399 = vmatpush1.msra.mxu0 0.0
    %400 = vmatprep.subr.mxu0 0.0
    %401 = vmatpush1.msra.mxu0 0.0
    %402 = vmatprep.subr.mxu0 0.0
    %403 = vmatpush1.msra.mxu0 0.0
    %404 = vmatprep.subr.mxu0 0.0
    %405 = vmatpush1.msra.mxu0 0.0
    %406 = vmatprep.subr.mxu0 0.0
    %407 = vmatpush1.msra.mxu0 0.0
    %408 = vmatprep.subr.mxu0 0.0
    %409 = vmatpush1.msra.mxu0 0.0
    %410 = vmatprep.subr.mxu0 0.0
    %411 = vmatpush1.msra.mxu0 0.0
    %412 = vmatprep.subr.mxu0 0.0
    %413 = vmatpush1.msra.mxu0 0.0
    %414 = vmatprep.subr.mxu0 0.0
    %415 = vmatpush1.msra.mxu0 0.0
    %416 = vmatprep.subr.mxu0 0.0
    %417 = vmatpush1.msra.mxu0 0.0
    %418 = vmatprep.subr.mxu0 0.0
    %419 = vmatpush1.msra.mxu0 0.0
    %420 = vmatprep.subr.mxu0 0.0
    %421 = vmatpush1.msra.mxu0 0.0
    %422 = vmatprep.subr.mxu0 0.0
    %423 = vmatpush1.msra.mxu0 0.0
    %424 = vmatprep.subr.mxu0 0.0
    %425 = vmatpush1.msra.mxu0 0.0
    %426 = vmatprep.subr.mxu0 0.0
    %427 = vmatpush1.msra.mxu0 0.0
    %428 = vmatprep.subr.mxu0 0.0
    %429 = vmatpush1.msra.mxu0 0.0
    %430 = vmatprep.subr.mxu0 0.0
    %431 = vmatpush1.msra.mxu0 0.0
    %432 = vmatprep.mubr.f32.mxu0 0.0
    %433 = vmatmul.mubr.f32.gmra.mrb[0].mxu0 %v366
    %v434 = vpop.f32.mrb[0].mxu0
    %v435 = vadd.f32 0.0, %v434
    %v436 = vpop.f32.mrb[0].mxu0
    %437 = vdwg.mxu0
    %v438 = vadd.f32 %v365, %v435
    %v439 = vtanh.pop %v438
    %v440 = vxor.u32 %v438, 2147483648
    %v441 = vmul.f32 %v440, 1.442695
    %v442 = vpow.pop %v441
    %v443 = vadd.f32 %v442, 1.0
    %v444 = vrcp.pop %v443
    %v445 = vmul.f32 1.0, %v444
    %v446 = vmul.f32 %v445, %v345
    %448 = vrot.lane.b32.xlu0 %v439, 32
    %v449 = vpop.permute.xlu0 %448
    %v451 = vmul.f32 %v445, %v449
    %453 = vrot.lane.b32.xlu0 %v451, 32
    %v454 = vpop.permute.xlu0 %453
    %v456 = vadd.f32 %v446, %v454
    %v457 = vtanh.pop %v456
    %459 = vrot.lane.b32.xlu0 %v457, 32
    %v460 = vpop.permute.xlu0 %459
    %v462 = vmul.f32 %v445, %v460
    %464 = vrot.lane.b32.xlu0 %v462, 32
    %v465 = vpop.permute.xlu0 %464
    %s467 = scalar_lea.vmem [#allocation4], 24
    %468 = vst.msk [vmem:[%s467] sm:$0xff] %vm29, %v465
    %470 = vrot.lane.b32.xlu0 %v456, 64
    %v471 = vpop.permute.xlu0 %470
    %s473 = scalar_lea.vmem [#allocation6], 24
    %474 = vst.msk [vmem:[%s473] sm:$0xff] %vm29, %v471
    %s475 = scalar_lea.vmem %s0, 32
    %v476 = vld [vmem:[%s475] sm:$0xff]
    %v477 = vsel %vm29, %v465, 0
    %479 = vmatprep.subr.mxu0 0.0
    %480 = vmatpush1.msra.mxu0 %v22
    %481 = vmatprep.subr.mxu0 0.0
    %482 = vmatpush1.msra.mxu0 %v23
    %483 = vmatprep.subr.mxu0 0.0
    %484 = vmatpush1.msra.mxu0 %v24
    %485 = vmatprep.subr.mxu0 0.0
    %486 = vmatpush1.msra.mxu0 %v25
    %487 = vmatprep.subr.mxu0 0.0
    %488 = vmatpush1.msra.mxu0 0.0
    %489 = vmatprep.subr.mxu0 0.0
    %490 = vmatpush1.msra.mxu0 0.0
    %491 = vmatprep.subr.mxu0 0.0
    %492 = vmatpush1.msra.mxu0 0.0
    %493 = vmatprep.subr.mxu0 0.0
    %494 = vmatpush1.msra.mxu0 0.0
    %495 = vmatprep.subr.mxu0 0.0
    %496 = vmatpush1.msra.mxu0 0.0
    %497 = vmatprep.subr.mxu0 0.0
    %498 = vmatpush1.msra.mxu0 0.0
    %499 = vmatprep.subr.mxu0 0.0
    %500 = vmatpush1.msra.mxu0 0.0
    %501 = vmatprep.subr.mxu0 0.0
    %502 = vmatpush1.msra.mxu0 0.0
    %503 = vmatprep.subr.mxu0 0.0
    %504 = vmatpush1.msra.mxu0 0.0
    %505 = vmatprep.subr.mxu0 0.0
    %506 = vmatpush1.msra.mxu0 0.0
    %507 = vmatprep.subr.mxu0 0.0
    %508 = vmatpush1.msra.mxu0 0.0
    %509 = vmatprep.subr.mxu0 0.0
    %510 = vmatpush1.msra.mxu0 0.0
    %511 = vmatprep.subr.mxu0 0.0
    %512 = vmatpush1.msra.mxu0 0.0
    %513 = vmatprep.subr.mxu0 0.0
    %514 = vmatpush1.msra.mxu0 0.0
    %515 = vmatprep.subr.mxu0 0.0
    %516 = vmatpush1.msra.mxu0 0.0
    %517 = vmatprep.subr.mxu0 0.0
    %518 = vmatpush1.msra.mxu0 0.0
    %519 = vmatprep.subr.mxu0 0.0
    %520 = vmatpush1.msra.mxu0 0.0
    %521 = vmatprep.subr.mxu0 0.0
    %522 = vmatpush1.msra.mxu0 0.0
    %523 = vmatprep.subr.mxu0 0.0
    %524 = vmatpush1.msra.mxu0 0.0
    %525 = vmatprep.subr.mxu0 0.0
    %526 = vmatpush1.msra.mxu0 0.0
    %527 = vmatprep.subr.mxu0 0.0
    %528 = vmatpush1.msra.mxu0 0.0
    %529 = vmatprep.subr.mxu0 0.0
    %530 = vmatpush1.msra.mxu0 0.0
    %531 = vmatprep.subr.mxu0 0.0
    %532 = vmatpush1.msra.mxu0 0.0
    %533 = vmatprep.subr.mxu0 0.0
    %534 = vmatpush1.msra.mxu0 0.0
    %535 = vmatprep.subr.mxu0 0.0
    %536 = vmatpush1.msra.mxu0 0.0
    %537 = vmatprep.subr.mxu0 0.0
    %538 = vmatpush1.msra.mxu0 0.0
    %539 = vmatprep.subr.mxu0 0.0
    %540 = vmatpush1.msra.mxu0 0.0
    %541 = vmatprep.subr.mxu0 0.0
    %542 = vmatpush1.msra.mxu0 0.0
    %543 = vmatprep.mubr.f32.mxu0 0.0
    %544 = vmatmul.mubr.f32.gmra.mrb[0].mxu0 %v477
    %v545 = vpop.f32.mrb[0].mxu0
    %v546 = vadd.f32 0.0, %v545
    %v547 = vpop.f32.mrb[0].mxu0
    %548 = vdwg.mxu0
    %v549 = vadd.f32 %v476, %v546
    %v550 = vtanh.pop %v549
    %v551 = vxor.u32 %v549, 2147483648
    %v552 = vmul.f32 %v551, 1.442695
    %v553 = vpow.pop %v552
    %v554 = vadd.f32 %v553, 1.0
    %v555 = vrcp.pop %v554
    %v556 = vmul.f32 1.0, %v555
    %v557 = vmul.f32 %v556, %v456
    %559 = vrot.lane.b32.xlu0 %v550, 32
    %v560 = vpop.permute.xlu0 %559
    %v562 = vmul.f32 %v556, %v560
    %564 = vrot.lane.b32.xlu0 %v562, 32
    %v565 = vpop.permute.xlu0 %564
    %v567 = vadd.f32 %v557, %v565
    %v568 = vtanh.pop %v567
    %570 = vrot.lane.b32.xlu0 %v568, 32
    %v571 = vpop.permute.xlu0 %570
    %v573 = vmul.f32 %v556, %v571
    %575 = vrot.lane.b32.xlu0 %v573, 32
    %v576 = vpop.permute.xlu0 %575
    %s578 = scalar_lea.vmem [#allocation4], 32
    %579 = vst.msk [vmem:[%s578] sm:$0xff] %vm29, %v576
    %581 = vrot.lane.b32.xlu0 %v567, 64
    %v582 = vpop.permute.xlu0 %581
    %s584 = scalar_lea.vmem [#allocation6], 32
    %585 = vst.msk [vmem:[%s584] sm:$0xff] %vm29, %v582
    %s586 = scalar_lea.vmem %s0, 40
    %v587 = vld [vmem:[%s586] sm:$0xff]
    %v588 = vsel %vm29, %v576, 0
    %590 = vmatprep.subr.mxu0 0.0
    %591 = vmatpush1.msra.mxu0 %v22
    %592 = vmatprep.subr.mxu0 0.0
    %593 = vmatpush1.msra.mxu0 %v23
    %594 = vmatprep.subr.mxu0 0.0
    %595 = vmatpush1.msra.mxu0 %v24
    %596 = vmatprep.subr.mxu0 0.0
    %597 = vmatpush1.msra.mxu0 %v25
    %598 = vmatprep.subr.mxu0 0.0
    %599 = vmatpush1.msra.mxu0 0.0
    %600 = vmatprep.subr.mxu0 0.0
    %601 = vmatpush1.msra.mxu0 0.0
    %602 = vmatprep.subr.mxu0 0.0
    %603 = vmatpush1.msra.mxu0 0.0
    %604 = vmatprep.subr.mxu0 0.0
    %605 = vmatpush1.msra.mxu0 0.0
    %606 = vmatprep.subr.mxu0 0.0
    %607 = vmatpush1.msra.mxu0 0.0
    %608 = vmatprep.subr.mxu0 0.0
    %609 = vmatpush1.msra.mxu0 0.0
    %610 = vmatprep.subr.mxu0 0.0
    %611 = vmatpush1.msra.mxu0 0.0
    %612 = vmatprep.subr.mxu0 0.0
    %613 = vmatpush1.msra.mxu0 0.0
    %614 = vmatprep.subr.mxu0 0.0
    %615 = vmatpush1.msra.mxu0 0.0
    %616 = vmatprep.subr.mxu0 0.0
    %617 = vmatpush1.msra.mxu0 0.0
    %618 = vmatprep.subr.mxu0 0.0
    %619 = vmatpush1.msra.mxu0 0.0
    %620 = vmatprep.subr.mxu0 0.0
    %621 = vmatpush1.msra.mxu0 0.0
    %622 = vmatprep.subr.mxu0 0.0
    %623 = vmatpush1.msra.mxu0 0.0
    %624 = vmatprep.subr.mxu0 0.0
    %625 = vmatpush1.msra.mxu0 0.0
    %626 = vmatprep.subr.mxu0 0.0
    %627 = vmatpush1.msra.mxu0 0.0
    %628 = vmatprep.subr.mxu0 0.0
    %629 = vmatpush1.msra.mxu0 0.0
    %630 = vmatprep.subr.mxu0 0.0
    %631 = vmatpush1.msra.mxu0 0.0
    %632 = vmatprep.subr.mxu0 0.0
    %633 = vmatpush1.msra.mxu0 0.0
    %634 = vmatprep.subr.mxu0 0.0
    %635 = vmatpush1.msra.mxu0 0.0
    %636 = vmatprep.subr.mxu0 0.0
    %637 = vmatpush1.msra.mxu0 0.0
    %638 = vmatprep.subr.mxu0 0.0
    %639 = vmatpush1.msra.mxu0 0.0
    %640 = vmatprep.subr.mxu0 0.0
    %641 = vmatpush1.msra.mxu0 0.0
    %642 = vmatprep.subr.mxu0 0.0
    %643 = vmatpush1.msra.mxu0 0.0
    %644 = vmatprep.subr.mxu0 0.0
    %645 = vmatpush1.msra.mxu0 0.0
    %646 = vmatprep.subr.mxu0 0.0
    %647 = vmatpush1.msra.mxu0 0.0
    %648 = vmatprep.subr.mxu0 0.0
    %649 = vmatpush1.msra.mxu0 0.0
    %650 = vmatprep.subr.mxu0 0.0
    %651 = vmatpush1.msra.mxu0 0.0
    %652 = vmatprep.subr.mxu0 0.0
    %653 = vmatpush1.msra.mxu0 0.0
    %654 = vmatprep.mubr.f32.mxu0 0.0
    %655 = vmatmul.mubr.f32.gmra.mrb[0].mxu0 %v588
    %v656 = vpop.f32.mrb[0].mxu0
    %v657 = vadd.f32 0.0, %v656
    %v658 = vpop.f32.mrb[0].mxu0
    %659 = vdwg.mxu0
    %v660 = vadd.f32 %v587, %v657
    %v661 = vtanh.pop %v660
    %v662 = vxor.u32 %v660, 2147483648
    %v663 = vmul.f32 %v662, 1.442695
    %v664 = vpow.pop %v663
    %v665 = vadd.f32 %v664, 1.0
    %v666 = vrcp.pop %v665
    %v667 = vmul.f32 1.0, %v666
    %v668 = vmul.f32 %v667, %v567
    %670 = vrot.lane.b32.xlu0 %v661, 32
    %v671 = vpop.permute.xlu0 %670
    %v673 = vmul.f32 %v667, %v671
    %675 = vrot.lane.b32.xlu0 %v673, 32
    %v676 = vpop.permute.xlu0 %675
    %v678 = vadd.f32 %v668, %v676
    %v679 = vtanh.pop %v678
    %681 = vrot.lane.b32.xlu0 %v679, 32
    %v682 = vpop.permute.xlu0 %681
    %v684 = vmul.f32 %v667, %v682
    %686 = vrot.lane.b32.xlu0 %v684, 32
    %v687 = vpop.permute.xlu0 %686
    %s689 = scalar_lea.vmem [#allocation4], 40
    %690 = vst.msk [vmem:[%s689] sm:$0xff] %vm29, %v687
    %692 = vrot.lane.b32.xlu0 %v678, 64
    %v693 = vpop.permute.xlu0 %692
    %s695 = scalar_lea.vmem [#allocation6], 40
    %696 = vst.msk [vmem:[%s695] sm:$0xff] %vm29, %v693
    %s697 = scalar_lea.vmem %s0, 48
    %v698 = vld [vmem:[%s697] sm:$0xff]
    %v699 = vsel %vm29, %v687, 0
    %701 = vmatprep.subr.mxu0 0.0
    %702 = vmatpush1.msra.mxu0 %v22
    %703 = vmatprep.subr.mxu0 0.0
    %704 = vmatpush1.msra.mxu0 %v23
    %705 = vmatprep.subr.mxu0 0.0
    %706 = vmatpush1.msra.mxu0 %v24
    %707 = vmatprep.subr.mxu0 0.0
    %708 = vmatpush1.msra.mxu0 %v25
    %709 = vmatprep.subr.mxu0 0.0
    %710 = vmatpush1.msra.mxu0 0.0
    %711 = vmatprep.subr.mxu0 0.0
    %712 = vmatpush1.msra.mxu0 0.0
    %713 = vmatprep.subr.mxu0 0.0
    %714 = vmatpush1.msra.mxu0 0.0
    %715 = vmatprep.subr.mxu0 0.0
    %716 = vmatpush1.msra.mxu0 0.0
    %717 = vmatprep.subr.mxu0 0.0
    %718 = vmatpush1.msra.mxu0 0.0
    %719 = vmatprep.subr.mxu0 0.0
    %720 = vmatpush1.msra.mxu0 0.0
    %721 = vmatprep.subr.mxu0 0.0
    %722 = vmatpush1.msra.mxu0 0.0
    %723 = vmatprep.subr.mxu0 0.0
    %724 = vmatpush1.msra.mxu0 0.0
    %725 = vmatprep.subr.mxu0 0.0
    %726 = vmatpush1.msra.mxu0 0.0
    %727 = vmatprep.subr.mxu0 0.0
    %728 = vmatpush1.msra.mxu0 0.0
    %729 = vmatprep.subr.mxu0 0.0
    %730 = vmatpush1.msra.mxu0 0.0
    %731 = vmatprep.subr.mxu0 0.0
    %732 = vmatpush1.msra.mxu0 0.0
    %733 = vmatprep.subr.mxu0 0.0
    %734 = vmatpush1.msra.mxu0 0.0
    %735 = vmatprep.subr.mxu0 0.0
    %736 = vmatpush1.msra.mxu0 0.0
    %737 = vmatprep.subr.mxu0 0.0
    %738 = vmatpush1.msra.mxu0 0.0
    %739 = vmatprep.subr.mxu0 0.0
    %740 = vmatpush1.msra.mxu0 0.0
    %741 = vmatprep.subr.mxu0 0.0
    %742 = vmatpush1.msra.mxu0 0.0
    %743 = vmatprep.subr.mxu0 0.0
    %744 = vmatpush1.msra.mxu0 0.0
    %745 = vmatprep.subr.mxu0 0.0
    %746 = vmatpush1.msra.mxu0 0.0
    %747 = vmatprep.subr.mxu0 0.0
    %748 = vmatpush1.msra.mxu0 0.0
    %749 = vmatprep.subr.mxu0 0.0
    %750 = vmatpush1.msra.mxu0 0.0
    %751 = vmatprep.subr.mxu0 0.0
    %752 = vmatpush1.msra.mxu0 0.0
    %753 = vmatprep.subr.mxu0 0.0
    %754 = vmatpush1.msra.mxu0 0.0
    %755 = vmatprep.subr.mxu0 0.0
    %756 = vmatpush1.msra.mxu0 0.0
    %757 = vmatprep.subr.mxu0 0.0
    %758 = vmatpush1.msra.mxu0 0.0
    %759 = vmatprep.subr.mxu0 0.0
    %760 = vmatpush1.msra.mxu0 0.0
    %761 = vmatprep.subr.mxu0 0.0
    %762 = vmatpush1.msra.mxu0 0.0
    %763 = vmatprep.subr.mxu0 0.0
    %764 = vmatpush1.msra.mxu0 0.0
    %765 = vmatprep.mubr.f32.mxu0 0.0
    %766 = vmatmul.mubr.f32.gmra.mrb[0].mxu0 %v699
    %v767 = vpop.f32.mrb[0].mxu0
    %v768 = vadd.f32 0.0, %v767
    %v769 = vpop.f32.mrb[0].mxu0
    %770 = vdwg.mxu0
    %v771 = vadd.f32 %v698, %v768
    %v772 = vtanh.pop %v771
    %v773 = vxor.u32 %v771, 2147483648
    %v774 = vmul.f32 %v773, 1.442695
    %v775 = vpow.pop %v774
    %v776 = vadd.f32 %v775, 1.0
    %v777 = vrcp.pop %v776
    %v778 = vmul.f32 1.0, %v777
    %v779 = vmul.f32 %v778, %v678
    %781 = vrot.lane.b32.xlu0 %v772, 32
    %v782 = vpop.permute.xlu0 %781
    %v784 = vmul.f32 %v778, %v782
    %786 = vrot.lane.b32.xlu0 %v784, 32
    %v787 = vpop.permute.xlu0 %786
    %v789 = vadd.f32 %v779, %v787
    %v790 = vtanh.pop %v789
    %792 = vrot.lane.b32.xlu0 %v790, 32
    %v793 = vpop.permute.xlu0 %792
    %v795 = vmul.f32 %v778, %v793
    %797 = vrot.lane.b32.xlu0 %v795, 32
    %v798 = vpop.permute.xlu0 %797
    %s800 = scalar_lea.vmem [#allocation4], 48
    %801 = vst.msk [vmem:[%s800] sm:$0xff] %vm29, %v798
    %803 = vrot.lane.b32.xlu0 %v789, 64
    %v804 = vpop.permute.xlu0 %803
    %s806 = scalar_lea.vmem [#allocation6], 48
    %807 = vst.msk [vmem:[%s806] sm:$0xff] %vm29, %v804
    %s808 = scalar_lea.vmem %s0, 56
    %v809 = vld [vmem:[%s808] sm:$0xff]
    %v810 = vsel %vm29, %v798, 0
    %812 = vmatprep.subr.mxu0 0.0
    %813 = vmatpush1.msra.mxu0 %v22
    %814 = vmatprep.subr.mxu0 0.0
    %815 = vmatpush1.msra.mxu0 %v23
    %816 = vmatprep.subr.mxu0 0.0
    %817 = vmatpush1.msra.mxu0 %v24
    %818 = vmatprep.subr.mxu0 0.0
    %819 = vmatpush1.msra.mxu0 %v25
    %820 = vmatprep.subr.mxu0 0.0
    %821 = vmatpush1.msra.mxu0 0.0
    %822 = vmatprep.subr.mxu0 0.0
    %823 = vmatpush1.msra.mxu0 0.0
    %824 = vmatprep.subr.mxu0 0.0
    %825 = vmatpush1.msra.mxu0 0.0
    %826 = vmatprep.subr.mxu0 0.0
    %827 = vmatpush1.msra.mxu0 0.0
    %828 = vmatprep.subr.mxu0 0.0
    %829 = vmatpush1.msra.mxu0 0.0
    %830 = vmatprep.subr.mxu0 0.0
    %831 = vmatpush1.msra.mxu0 0.0
    %832 = vmatprep.subr.mxu0 0.0
    %833 = vmatpush1.msra.mxu0 0.0
    %834 = vmatprep.subr.mxu0 0.0
    %835 = vmatpush1.msra.mxu0 0.0
    %836 = vmatprep.subr.mxu0 0.0
    %837 = vmatpush1.msra.mxu0 0.0
    %838 = vmatprep.subr.mxu0 0.0
    %839 = vmatpush1.msra.mxu0 0.0
    %840 = vmatprep.subr.mxu0 0.0
    %841 = vmatpush1.msra.mxu0 0.0
    %842 = vmatprep.subr.mxu0 0.0
    %843 = vmatpush1.msra.mxu0 0.0
    %844 = vmatprep.subr.mxu0 0.0
    %845 = vmatpush1.msra.mxu0 0.0
    %846 = vmatprep.subr.mxu0 0.0
    %847 = vmatpush1.msra.mxu0 0.0
    %848 = vmatprep.subr.mxu0 0.0
    %849 = vmatpush1.msra.mxu0 0.0
    %850 = vmatprep.subr.mxu0 0.0
    %851 = vmatpush1.msra.mxu0 0.0
    %852 = vmatprep.subr.mxu0 0.0
    %853 = vmatpush1.msra.mxu0 0.0
    %854 = vmatprep.subr.mxu0 0.0
    %855 = vmatpush1.msra.mxu0 0.0
    %856 = vmatprep.subr.mxu0 0.0
    %857 = vmatpush1.msra.mxu0 0.0
    %858 = vmatprep.subr.mxu0 0.0
    %859 = vmatpush1.msra.mxu0 0.0
    %860 = vmatprep.subr.mxu0 0.0
    %861 = vmatpush1.msra.mxu0 0.0
    %862 = vmatprep.subr.mxu0 0.0
    %863 = vmatpush1.msra.mxu0 0.0
    %864 = vmatprep.subr.mxu0 0.0
    %865 = vmatpush1.msra.mxu0 0.0
    %866 = vmatprep.subr.mxu0 0.0
    %867 = vmatpush1.msra.mxu0 0.0
    %868 = vmatprep.subr.mxu0 0.0
    %869 = vmatpush1.msra.mxu0 0.0
    %870 = vmatprep.subr.mxu0 0.0
    %871 = vmatpush1.msra.mxu0 0.0
    %872 = vmatprep.subr.mxu0 0.0
    %873 = vmatpush1.msra.mxu0 0.0
    %874 = vmatprep.subr.mxu0 0.0
    %875 = vmatpush1.msra.mxu0 0.0
    %876 = vmatprep.mubr.f32.mxu0 0.0
    %877 = vmatmul.mubr.f32.gmra.mrb[0].mxu0 %v810
    %v878 = vpop.f32.mrb[0].mxu0
    %v879 = vadd.f32 0.0, %v878
    %v880 = vpop.f32.mrb[0].mxu0
    %881 = vdwg.mxu0
    %v882 = vadd.f32 %v809, %v879
    %v883 = vtanh.pop %v882
    %v884 = vxor.u32 %v882, 2147483648
    %v885 = vmul.f32 %v884, 1.442695
    %v886 = vpow.pop %v885
    %v887 = vadd.f32 %v886, 1.0
    %v888 = vrcp.pop %v887
    %v889 = vmul.f32 1.0, %v888
    %v890 = vmul.f32 %v889, %v789
    %892 = vrot.lane.b32.xlu0 %v883, 32
    %v893 = vpop.permute.xlu0 %892
    %v895 = vmul.f32 %v889, %v893
    %897 = vrot.lane.b32.xlu0 %v895, 32
    %v898 = vpop.permute.xlu0 %897
    %v900 = vadd.f32 %v890, %v898
    %v901 = vtanh.pop %v900
    %903 = vrot.lane.b32.xlu0 %v901, 32
    %v904 = vpop.permute.xlu0 %903
    %v906 = vmul.f32 %v889, %v904
    %908 = vrot.lane.b32.xlu0 %v906, 32
    %v909 = vpop.permute.xlu0 %908
    %s911 = scalar_lea.vmem [#allocation4], 56
    %912 = vst.msk [vmem:[%s911] sm:$0xff] %vm29, %v909
    %914 = vrot.lane.b32.xlu0 %v900, 64
    %v915 = vpop.permute.xlu0 %914
    %s917 = scalar_lea.vmem [#allocation6], 56
    %918 = vst.msk [vmem:[%s917] sm:$0xff] %vm29, %v915
    %919 = vst.msk [vmem:[#allocation2] sm:$0xff] %vm29, %v909
    %920 = vst.msk [vmem:[#allocation3] sm:$0xff] %vm29, %v915
    // Predicated region
    $region14: #{lstm_forward.1} parent=1 // pred_check
      _
    $region15: #{lstm_forward.1} parent=1 // pred_check_branch
      %922 = sbr.rel (0) target = $region17
    $region16: #{lstm_forward.1} parent=1 // pred_region
      %s924 = ssub.s32 1024, 1024
      %925 = vsyncadd [#allocation5], %s924
      %s926 = sshll.u32 [#allocation4], 4
      %s927 = int_to_ptr.vmem [resolvable:$true] %s926
      %932 = dma.vmem_to_hbm [thread:$0]  %s927, 1024, %s2, [#allocation5], 128, 128, 8
    $region17: #{lstm_forward.1} parent=1 // pred_fallthru
      _
    // Predicated region
    $region18: #{lstm_forward.1} parent=1 // pred_check
      _
    $region19: #{lstm_forward.1} parent=1 // pred_check_branch
      %934 = sbr.rel (0) target = $region21
    $region20: #{lstm_forward.1} parent=1 // pred_region
      %s936 = ssub.s32 1024, 1024
      %937 = vsyncadd [#allocation7], %s936
      %s938 = sshll.u32 [#allocation6], 4
      %s939 = int_to_ptr.vmem [resolvable:$true] %s938
      %944 = dma.vmem_to_hbm [thread:$0]  %s939, 1024, %s3, [#allocation7], 128, 128, 8
    $region21: #{lstm_forward.1} parent=1 // pred_fallthru
      _
    // Predicated region
    $region22: #{lstm_forward.1} parent=1 // pred_check
      _
    $region23: #{lstm_forward.1} parent=1 // pred_check_branch
      %946 = sbr.rel (0) target = $region25
    $region24: #{lstm_forward.1} parent=1 // pred_region
      %947 = dma.done [#allocation5], 1024
    $region25: #{lstm_forward.1} parent=1 // pred_fallthru
      _
    // Predicated region
    $region26: #{lstm_forward.1} parent=1 // pred_check
      _
    $region27: #{lstm_forward.1} parent=1 // pred_check_branch
      %949 = sbr.rel (0) target = $region29
    $region28: #{lstm_forward.1} parent=1 // pred_region
      %950 = dma.done [#allocation7], 1024
    $region29: #{lstm_forward.1} parent=1 // pred_fallthru
      _
    %951 = vsyncpa [#allocation5], 1
    %952 = vsyncpa [#allocation7], 1

</llo_original>
